<compile_context>
chip_gen: v5e
topology: v5e:2x2
jax: 0.10.0
libtpu: 0.0.40
codegen_flags: <defaults>
</compile_context>

<pallas_src>
import functools

import numpy as np
import jax
import jax.numpy as jnp
from jax.experimental import pallas as pl
from jax.experimental.pallas import tpu as pltpu


VMEM_LIMIT = 48 * 1024 * 1024   # safe on v5e/v6e (128 MiB) and v7x (64 MiB)


def _rup(v, m):
    return (v + m - 1) // m * m


def _pad_to(a, shape, value=0.0):
    if tuple(a.shape) == tuple(shape):
        return a
    pads = [(0, t - s) for s, t in zip(a.shape, shape)]
    return jnp.pad(a, pads, constant_values=value)


# ---------------------------------------------------------------------------
# Pallas kernels
# ---------------------------------------------------------------------------

def _matmul_kernel(*refs, act, has_res):
    """Tiled matmul, bf16 inputs / f32 accumulate, fused scale/shift (+residual) + act."""
    if has_res:
        x_ref, w_ref, scale_ref, shift_ref, res_ref, o_ref, acc_ref = refs
    else:
        x_ref, w_ref, scale_ref, shift_ref, o_ref, acc_ref = refs

    @pl.when(pl.program_id(2) == 0)
    def _():
        acc_ref[...] = jnp.zeros_like(acc_ref)

    acc_ref[...] += jnp.dot(x_ref[...], w_ref[...],
                            preferred_element_type=jnp.float32)

    @pl.when(pl.program_id(2) == pl.num_programs(2) - 1)
    def _():
        y = acc_ref[...] * scale_ref[...] + shift_ref[...]
        if has_res:
            y = y + res_ref[...]
        if act == "relu":
            y = jnp.maximum(y, 0.0)
        elif act == "sigmoid":
            y = jax.nn.sigmoid(y)
        o_ref[...] = y.astype(o_ref.dtype)


@functools.partial(jax.jit, static_argnames=("act",))
def pallas_matmul(x, w, scale, shift, residual=None, act="none"):
    """y = act((x @ w) * scale + shift [+ residual]).  x:(M,K) w:(K,N) bf16 in, f32 out."""
    M, K = x.shape
    _, N = w.shape

    # -- tile selection (pad only when required) --
    if M <= 512:
        tm, Mp = M, M
    else:
        tm = 256
        Mp = _rup(M, tm)
    if N <= 512:
        tn, Np = N, N
    elif N % 256 == 0:
        tn, Np = 256, N
    elif N % 128 == 0:
        tn, Np = 128, N
    else:
        tn, Np = 128, _rup(N, 128)
    if K <= 1024:
        tk, Kp = K, K
    else:
        for cand in (1024, 512, 256, 128):
            if K % cand == 0:
                tk, Kp = cand, K
                break
        else:
            tk, Kp = 256, _rup(K, 256)

    xp = _pad_to(x.astype(jnp.bfloat16), (Mp, Kp))
    wp = _pad_to(w.astype(jnp.bfloat16), (Kp, Np))
    sp = _pad_to(scale.reshape(1, N).astype(jnp.float32), (1, Np))
    bp = _pad_to(shift.reshape(1, N).astype(jnp.float32), (1, Np))

    in_specs = [
        pl.BlockSpec((tm, tk), lambda i, j, k: (i, k)),
        pl.BlockSpec((tk, tn), lambda i, j, k: (k, j)),
        pl.BlockSpec((1, tn), lambda i, j, k: (0, j)),
        pl.BlockSpec((1, tn), lambda i, j, k: (0, j)),
    ]
    args = [xp, wp, sp, bp]
    has_res = residual is not None
    if has_res:
        rp = _pad_to(residual.astype(jnp.float32), (Mp, Np))
        in_specs.append(pl.BlockSpec((tm, tn), lambda i, j, k: (i, j)))
        args.append(rp)

    grid = (Mp // tm, Np // tn, Kp // tk)
    out = pl.pallas_call(
        functools.partial(_matmul_kernel, act=act, has_res=has_res),
        out_shape=jax.ShapeDtypeStruct((Mp, Np), jnp.float32),
        grid_spec=pltpu.PrefetchScalarGridSpec(
            num_scalar_prefetch=0,
            grid=grid,
            in_specs=in_specs,
            out_specs=pl.BlockSpec((tm, tn), lambda i, j, k: (i, j)),
            scratch_shapes=[pltpu.VMEM((tm, tn), jnp.float32)],
        ),
        compiler_params=pltpu.CompilerParams(
            dimension_semantics=("parallel", "parallel", "arbitrary"),
            vmem_limit_bytes=VMEM_LIMIT,
        ),
    )(*args)
    return out[:M, :N]


def _grouped_matmul_kernel(x_ref, w_ref, scale_ref, shift_ref, o_ref, *, act):
    """Per-group matmuls (ResNeXt grouped 3x3 conv) with fused BN + ReLU."""
    G = x_ref.shape[0]
    for g in range(G):
        y = jnp.dot(x_ref[g], w_ref[g], preferred_element_type=jnp.float32)
        y = y * scale_ref[g] + shift_ref[g]
        if act == "relu":
            y = jnp.maximum(y, 0.0)
        o_ref[g] = y.astype(o_ref.dtype)


@functools.partial(jax.jit, static_argnames=("act",))
def pallas_grouped_matmul(xg, wg, scale, shift, act="relu"):
    """xg:(G,M,Kg) bf16, wg:(G,Kg,Og) bf16, scale/shift:(G,1,Og) f32 -> (G,M,Og) f32."""
    G, M, Kg = xg.shape
    Og = wg.shape[2]
    if M <= 512:
        tm, Mp = M, M
    else:
        tm = 256
        Mp = _rup(M, tm)
    xgp = _pad_to(xg.astype(jnp.bfloat16), (G, Mp, Kg))

    out = pl.pallas_call(
        functools.partial(_grouped_matmul_kernel, act=act),
        out_shape=jax.ShapeDtypeStruct((G, Mp, Og), jnp.float32),
        grid_spec=pltpu.PrefetchScalarGridSpec(
            num_scalar_prefetch=0,
            grid=(Mp // tm,),
            in_specs=[
                pl.BlockSpec((G, tm, Kg), lambda i: (0, i, 0)),
                pl.BlockSpec((G, Kg, Og), lambda i: (0, 0, 0)),
                pl.BlockSpec((G, 1, Og), lambda i: (0, 0, 0)),
                pl.BlockSpec((G, 1, Og), lambda i: (0, 0, 0)),
            ],
            out_specs=pl.BlockSpec((G, tm, Og), lambda i: (0, i, 0)),
        ),
        compiler_params=pltpu.CompilerParams(
            dimension_semantics=("parallel",),
            vmem_limit_bytes=VMEM_LIMIT,
        ),
    )(xgp, wg.astype(jnp.bfloat16), scale, shift)
    return out[:, :M]


def _dwconv_kernel(x_ref, w_ref, o_ref, *, kh, kw, dil):
    """Depthwise 3x3 conv: in-kernel tap loop over a padded activation tile."""
    Ho, Wo = o_ref.shape[1], o_ref.shape[2]
    acc = None
    for i in range(kh):
        for j in range(kw):
            win = x_ref[0, i * dil:i * dil + Ho, j * dil:j * dil + Wo, :]
            term = win * w_ref[i * kw + j]
            acc = term if acc is None else acc + term
    o_ref[0] = acc


@functools.partial(jax.jit, static_argnames=("padding", "dilation"))
def pallas_dwconv(x, wt, padding, dilation):
    """Depthwise conv, stride 1, 3x3.  x:(B,H,W,C) f32, wt:(9,1,C) f32."""
    B, H, W, C = x.shape
    kh = kw = 3
    Ho = H + 2 * padding - dilation * (kh - 1)
    Wo = W + 2 * padding - dilation * (kw - 1)
    Cp = _rup(C, 128)
    Cb = 128
    Hp, Wp = H + 2 * padding, W + 2 * padding
    xp = jnp.pad(x, ((0, 0), (padding, padding), (padding, padding), (0, Cp - C)))
    wtp = wt if Cp == C else jnp.pad(wt, ((0, 0), (0, 0), (0, Cp - C)))
    # TODO(synk): for very large feature maps (>~256x256 per image) the H/W dims
    #             should additionally be tiled; channel tiling is sufficient here.
    out = pl.pallas_call(
        functools.partial(_dwconv_kernel, kh=kh, kw=kw, dil=dilation),
        out_shape=jax.ShapeDtypeStruct((B, Ho, Wo, Cp), jnp.float32),
        grid_spec=pltpu.PrefetchScalarGridSpec(
            num_scalar_prefetch=0,
            grid=(B, Cp // Cb),
            in_specs=[
                pl.BlockSpec((1, Hp, Wp, Cb), lambda b, c: (b, 0, 0, c)),
                pl.BlockSpec((kh * kw, 1, Cb), lambda b, c: (0, 0, c)),
            ],
            out_specs=pl.BlockSpec((1, Ho, Wo, Cb), lambda b, c: (b, 0, 0, c)),
        ),
        compiler_params=pltpu.CompilerParams(
            dimension_semantics=("parallel", "parallel"),
            vmem_limit_bytes=VMEM_LIMIT,
        ),
    )(xp, wtp)
    return out[..., :C]


def _window_max_kernel(t_ref, o_ref):
    acc = t_ref[0]
    for t in range(1, t_ref.shape[0]):
        acc = jnp.maximum(acc, t_ref[t])
    o_ref[...] = acc


@jax.jit
def pallas_window_max(taps):
    T, M, C = taps.shape
    if M <= 1024:
        tm, Mp = M, M
    else:
        tm = 512
        Mp = _rup(M, tm)
    tp = taps if Mp == M else jnp.pad(
        taps, ((0, 0), (0, Mp - M), (0, 0)), constant_values=-np.inf)
    out = pl.pallas_call(
        _window_max_kernel,
        out_shape=jax.ShapeDtypeStruct((Mp, C), jnp.float32),
        grid_spec=pltpu.PrefetchScalarGridSpec(
            num_scalar_prefetch=0,
            grid=(Mp // tm,),
            in_specs=[pl.BlockSpec((T, tm, C), lambda i: (0, i, 0))],
            out_specs=pl.BlockSpec((tm, C), lambda i: (i, 0)),
        ),
        compiler_params=pltpu.CompilerParams(
            dimension_semantics=("parallel",),
            vmem_limit_bytes=VMEM_LIMIT,
        ),
    )(tp)
    return out[:M]


# ---------------------------------------------------------------------------
# Conv / pool / upsample wrappers (im2col glue in plain JAX)
# ---------------------------------------------------------------------------

def _window_slices(x, kh, kw, stride, padding, dilation, pad_value=0.0):
    B, H, W, C = x.shape
    Ho = (H + 2 * padding - dilation * (kh - 1) - 1) // stride + 1
    Wo = (W + 2 * padding - dilation * (kw - 1) - 1) // stride + 1
    xp = jnp.pad(x, ((0, 0), (padding, padding), (padding, padding), (0, 0)),
                 constant_values=pad_value)
    slices = []
    for i in range(kh):
        for j in range(kw):
            s = xp[:, i * dilation: i * dilation + (Ho - 1) * stride + 1: stride,
                      j * dilation: j * dilation + (Wo - 1) * stride + 1: stride, :]
            slices.append(s.reshape(B * Ho * Wo, C))
    return slices, (B, Ho, Wo)


def conv2d(x, w2d, kh=1, kw=1, stride=1, padding=0, dilation=1,
           scale=None, shift=None, act="none", residual=None):
    """Conv2d via (bf16) im2col + Pallas MXU matmul.  w2d: (kh*kw*I, O) bf16."""
    B, H, W, C = x.shape
    O = w2d.shape[1]
    xb = x.astype(jnp.bfloat16)
    if kh == 1 and kw == 1 and stride == 1 and padding == 0:
        cols, (Ho, Wo) = xb.reshape(B * H * W, C), (H, W)
    else:
        slices, (B, Ho, Wo) = _window_slices(xb, kh, kw, stride, padding, dilation)
        cols = jnp.concatenate(slices, axis=-1)              # (B*Ho*Wo, kh*kw*I)
    if scale is None:
        scale = jnp.ones((O,), jnp.float32)
    if shift is None:
        shift = jnp.zeros((O,), jnp.float32)
    res2d = None if residual is None else residual.reshape(B * Ho * Wo, O)
    y = pallas_matmul(cols, w2d, scale, shift, residual=res2d, act=act)
    return y.reshape(B, Ho, Wo, O)


def grouped_conv3x3(x, wg, scale, shift, stride, padding, dilation, act="relu"):
    """ResNeXt grouped 3x3 conv as a grouped Pallas matmul.  wg: (G, 9*Ig, Og)."""
    G = wg.shape[0]
    Og = wg.shape[2]
    B, H, W, C = x.shape
    Ig = C // G
    xb = x.astype(jnp.bfloat16)
    slices, (B, Ho, Wo) = _window_slices(xb, 3, 3, stride, padding, dilation)
    M = B * Ho * Wo
    cols = jnp.stack(slices, axis=1)                         # (M, 9, C)
    # TODO(synk): im2col still materializes the 9 taps (in bf16); an in-kernel tap
    #             loop for the grouped conv would further cut HBM traffic.
    xg = cols.reshape(M, 9, G, Ig).transpose(2, 0, 1, 3).reshape(G, M, 9 * Ig)
    sc = scale.reshape(G, 1, Og)
    sh = shift.reshape(G, 1, Og)
    y = pallas_grouped_matmul(xg, wg, sc, sh, act=act)       # (G, M, Og)
    return y.transpose(1, 0, 2).reshape(B, Ho, Wo, G * Og)


def maxpool_3x3_s2_p1(x):
    slices, (B, Ho, Wo) = _window_slices(x, 3, 3, 2, 1, 1, pad_value=-np.inf)
    taps = jnp.stack(slices, axis=0)
    y = pallas_window_max(taps)
    return y.reshape(B, Ho, Wo, x.shape[-1])


def _interp_matrix_align_corners(n_in, n_out):
    A = np.zeros((n_out, n_in), np.float32)
    if n_in == 1:
        A[:, 0] = 1.0
        return A
    for o in range(n_out):
        src = o * (n_in - 1) / (n_out - 1)
        i0 = int(np.floor(src))
        i1 = min(i0 + 1, n_in - 1)
        w = src - i0
        A[o, i0] += 1.0 - w
        A[o, i1] += w
    return A


def upsample_bilinear_x(x, scale_factor, act_final="none"):
    """nn.UpsamplingBilinear2d(scale_factor) via two Pallas matmuls; optional fused act."""
    B, H, W, C = x.shape
    Ho, Wo = H * scale_factor, W * scale_factor
    Ah = jnp.asarray(_interp_matrix_align_corners(H, Ho), jnp.bfloat16)
    Aw = jnp.asarray(_interp_matrix_align_corners(W, Wo), jnp.bfloat16)

    xh = jnp.transpose(x, (1, 0, 2, 3)).reshape(H, B * W * C).astype(jnp.bfloat16)
    yh = pallas_matmul(Ah, xh, jnp.ones((B * W * C,), jnp.float32),
                       jnp.zeros((B * W * C,), jnp.float32), act="none")
    yh = yh.reshape(Ho, B, W, C).transpose(1, 0, 2, 3)        # (B,Ho,W,C)

    xw = jnp.transpose(yh, (2, 0, 1, 3)).reshape(W, B * Ho * C).astype(jnp.bfloat16)
    yw = pallas_matmul(Aw, xw, jnp.ones((B * Ho * C,), jnp.float32),
                       jnp.zeros((B * Ho * C,), jnp.float32), act=act_final)
    return yw.reshape(Wo, B, Ho, C).transpose(1, 2, 0, 3)     # (B,Ho,Wo,C)


# ---------------------------------------------------------------------------
# Deterministic parameter construction (resnext50_32x4d + DeepLabV3+ decoder)
# ---------------------------------------------------------------------------

_PRNG = np.random.default_rng(0)
GROUPS = 32
BASE_WIDTH = 4


def _conv_w(o, i_per_group, kh, kw):
    fan_in = i_per_group * kh * kw
    w = _PRNG.standard_normal((o, i_per_group, kh, kw)) * np.sqrt(2.0 / fan_in)
    return w.astype(np.float32)


def _to_w2d(w):  # (O, I, kh, kw) -> (kh*kw*I, O) bf16, tap-major K ordering
    O, I, kh, kw = w.shape
    return jnp.asarray(np.transpose(w, (2, 3, 1, 0)).reshape(kh * kw * I, O),
                       jnp.bfloat16)


def _to_wg(w, groups):  # grouped (O, Ig, 3, 3) -> (G, 9*Ig, Og) bf16
    O, Ig, kh, kw = w.shape
    Og = O // groups
    out = np.zeros((groups, kh * kw * Ig, Og), np.float32)
    for g in range(groups):
        blk = w[g * Og:(g + 1) * Og]                          # (Og, Ig, kh, kw)
        out[g] = np.transpose(blk, (2, 3, 1, 0)).reshape(kh * kw * Ig, Og)
    return jnp.asarray(out, jnp.bfloat16)


def _to_dw(w):  # (C, 1, 3, 3) -> (9, 1, C) f32
    C = w.shape[0]
    return jnp.asarray(np.transpose(w[:, 0], (1, 2, 0)).reshape(9, 1, C), jnp.float32)


def _bn(c, eps=1e-5):
    # eval-mode BatchNorm, PyTorch default init: gamma=1, beta=0, rm=0, rv=1.
    scale = np.full((c,), 1.0 / np.sqrt(1.0 + eps), np.float32)
    shift = np.zeros((c,), np.float32)
    return jnp.asarray(scale), jnp.asarray(shift)


def _make_bottleneck(inplanes, planes, stride, dilation, downsample):
    width = int(planes * (BASE_WIDTH / 64.0)) * GROUPS
    out_ch = planes * 4
    p = {
        "conv1": _to_w2d(_conv_w(width, inplanes, 1, 1)), "bn1": _bn(width),
        "conv2": _to_wg(_conv_w(width, width // GROUPS, 3, 3), GROUPS), "bn2": _bn(width),
        "conv3": _to_w2d(_conv_w(out_ch, width, 1, 1)), "bn3": _bn(out_ch),
        "stride": stride, "dilation": dilation,
    }
    if downsample:
        p["down_w"] = _to_w2d(_conv_w(out_ch, inplanes, 1, 1))
        p["down_bn"] = _bn(out_ch)
    return p


def _make_layer(inplanes, planes, blocks, stride, dilation):
    layer = [_make_bottleneck(inplanes, planes, stride, dilation, True)]
    for _ in range(blocks - 1):
        layer.append(_make_bottleneck(planes * 4, planes, 1, dilation, False))
    return layer


def build_params(in_channels=3, classes=1):
    enc = {
        "stem_w": _to_w2d(_conv_w(64, in_channels, 7, 7)), "stem_bn": _bn(64),
        "layer1": _make_layer(64, 64, 3, 1, 1),
        "layer2": _make_layer(256, 128, 4, 2, 1),
        "layer3": _make_layer(512, 256, 6, 2, 1),
        # output_stride=16: smp make_dilated -> layer4 stride 1, dilation 2
        "layer4": _make_layer(1024, 512, 3, 1, 2),
    }
    dc = 256
    aspp = {
        "c1_w": _to_w2d(_conv_w(dc, 2048, 1, 1)), "c1_bn": _bn(dc),
        "sep": [],
        "pool_w": _to_w2d(_conv_w(dc, 2048, 1, 1)), "pool_bn": _bn(dc),
        "proj_w": _to_w2d(_conv_w(dc, 5 * dc, 1, 1)), "proj_bn": _bn(dc),
    }
    for rate in (12, 24, 36):
        aspp["sep"].append({
            "rate": rate,
            "dw": _to_dw(_conv_w(2048, 1, 3, 3)),
            "pw": _to_w2d(_conv_w(dc, 2048, 1, 1)),
            "bn": _bn(dc),
        })
    dec = {
        "aspp": aspp,
        "post_dw": _to_dw(_conv_w(dc, 1, 3, 3)),
        "post_pw": _to_w2d(_conv_w(dc, dc, 1, 1)), "post_bn": _bn(dc),
        "b1_w": _to_w2d(_conv_w(48, 256, 1, 1)), "b1_bn": _bn(48),
        "b2_dw": _to_dw(_conv_w(dc + 48, 1, 3, 3)),
        "b2_pw": _to_w2d(_conv_w(dc, dc + 48, 1, 1)), "b2_bn": _bn(dc),
    }
    head = {
        "w": _to_w2d(_conv_w(classes, dc, 1, 1)),   # SegmentationHead kernel_size=1
        "b": jnp.asarray(_PRNG.uniform(-0.1, 0.1, (classes,)).astype(np.float32)),
    }
    return {"encoder": enc, "decoder": dec, "head": head}


# ---------------------------------------------------------------------------
# Forward pass
# ---------------------------------------------------------------------------

def _conv_bn(x, w2d, bn, kh=1, kw=1, stride=1, padding=0, dilation=1,
             act="relu", residual=None):
    return conv2d(x, w2d, kh=kh, kw=kw, stride=stride, padding=padding,
                  dilation=dilation, scale=bn[0], shift=bn[1], act=act,
                  residual=residual)


def _bottleneck_fwd(x, p):
    out = _conv_bn(x, p["conv1"], p["bn1"], act="relu")
    out = grouped_conv3x3(out, p["conv2"], p["bn2"][0], p["bn2"][1],
                          stride=p["stride"], padding=p["dilation"],
                          dilation=p["dilation"], act="relu")
    if "down_w" in p:
        identity = _conv_bn(x, p["down_w"], p["down_bn"],
                            stride=p["stride"], act="none")
    else:
        identity = x
    # residual add + ReLU fused into conv3's matmul epilogue
    return _conv_bn(out, p["conv3"], p["bn3"], act="relu", residual=identity)


def _encoder_fwd(x, P):
    feats = [x]
    y = _conv_bn(x, P["stem_w"], P["stem_bn"], kh=7, kw=7,
                 stride=2, padding=3, act="relu")
    feats.append(y)
    y = maxpool_3x3_s2_p1(y)
    for name in ("layer1", "layer2", "layer3", "layer4"):
        for blk in P[name]:
            y = _bottleneck_fwd(y, blk)
        feats.append(y)
    return feats


def _sep_conv_bn_relu(x, dw, pw, bn, padding, dilation):
    y = pallas_dwconv(x, dw, padding=padding, dilation=dilation)
    return conv2d(y, pw, scale=bn[0], shift=bn[1], act="relu")


def _aspp_fwd(x, P):
    B, H, W, _ = x.shape
    branches = [conv2d(x, P["c1_w"], scale=P["c1_bn"][0],
                       shift=P["c1_bn"][1], act="relu")]
    for s in P["sep"]:
        branches.append(_sep_conv_bn_relu(x, s["dw"], s["pw"], s["bn"],
                                          padding=s["rate"], dilation=s["rate"]))
    g = jnp.mean(x, axis=(1, 2), keepdims=True)               # AdaptiveAvgPool2d(1)
    g = conv2d(g, P["pool_w"], scale=P["pool_bn"][0],
               shift=P["pool_bn"][1], act="relu")
    branches.append(jnp.broadcast_to(g, (B, H, W, g.shape[-1])))  # bilinear from 1x1 == broadcast
    cat = jnp.concatenate(branches, axis=-1)                  # (B,H,W,1280)
    # TODO(synk): nn.Dropout(0.5) and train-mode BN batch statistics are not modeled
    #             (inference/eval semantics: dropout = identity, BN = running stats).
    return conv2d(cat, P["proj_w"], scale=P["proj_bn"][0],
                  shift=P["proj_bn"][1], act="relu")


def _decoder_fwd(feats, P):
    y = _aspp_fwd(feats[-1], P["aspp"])
    y = _sep_conv_bn_relu(y, P["post_dw"], P["post_pw"], P["post_bn"], 1, 1)
    y = upsample_bilinear_x(y, 4)
    hr = conv2d(feats[-4], P["b1_w"], scale=P["b1_bn"][0],
                shift=P["b1_bn"][1], act="relu")
    cat = jnp.concatenate([y, hr], axis=-1)                   # (B,H/4,W/4,304)
    return _sep_conv_bn_relu(cat, P["b2_dw"], P["b2_pw"], P["b2_bn"], 1, 1)


def deeplabv3plus_forward(x_nchw, params):
    # public interface is NCHW (PyTorch); internals are NHWC.
    x = jnp.transpose(x_nchw, (0, 2, 3, 1)).astype(jnp.float32)
    feats = _encoder_fwd(x, params["encoder"])
    dec = _decoder_fwd(feats, params["decoder"])
    hp = params["head"]
    O = hp["w"].shape[1]
    logits = conv2d(dec, hp["w"], scale=jnp.ones((O,), jnp.float32),
                    shift=hp["b"], act="none")
    # final x4 bilinear upsample with sigmoid fused into the last matmul epilogue
    probs = upsample_bilinear_x(logits, 4, act_final="sigmoid")
    return jnp.transpose(probs, (0, 3, 1, 2))                 # NHWC -> NCHW


# ---------------------------------------------------------------------------

if __name__ == "__main__":
    B, CIN, H, W = 2, 3, 32, 32
    key = jax.random.PRNGKey(0)
    x = jax.random.normal(key, (B, CIN, H, W), jnp.float32)

    params = build_params(in_channels=CIN, classes=1)
    out = deeplabv3plus_forward(x, params)
    out = jax.block_until_ready(out)

    assert out.shape == (B, 1, H, W), out.shape
    assert bool(jnp.all(jnp.isfinite(out)))
    assert bool(jnp.all((out >= 0.0) & (out <= 1.0)))
    print("KERNEL_OK")
</pallas_src>

<mosaic_0001>
module attributes {stable_mosaic.version = 11 : i64} {
  func.func @_matmul_kernel(%arg0: i32, %arg1: i32, %arg2: i32, %arg3: memref<512x147xbf16, #tpu.memory_space<vmem>>, %arg4: memref<147x64xbf16, #tpu.memory_space<vmem>>, %arg5: memref<1x64xf32, #tpu.memory_space<vmem>>, %arg6: memref<1x64xf32, #tpu.memory_space<vmem>>, %arg7: memref<512x64xf32, #tpu.memory_space<vmem>>, %arg8: memref<512x64xf32, #tpu.memory_space<vmem>>) attributes {dimension_semantics = [#tpu.dimension_semantics<parallel>, #tpu.dimension_semantics<parallel>, #tpu.dimension_semantics<arbitrary>], iteration_bounds = array<i64: 1, 1, 1>, scalar_prefetch = 0 : i64, scratch_operands = 1 : i64, tpu.core_type = #tpu.core_type<tc>, window_params = [{transform_indices = @transform_0, window_bounds = array<i64: 512, 147>}, {transform_indices = @transform_1, window_bounds = array<i64: 147, 64>}, {transform_indices = @transform_2, window_bounds = array<i64: 1, 64>}, {transform_indices = @transform_3, window_bounds = array<i64: 1, 64>}, {transform_indices = @transform_4, window_bounds = array<i64: 512, 64>}]} {
    %c0_i32 = arith.constant 0 : i32
    %0 = arith.cmpi eq, %arg2, %c0_i32 : i32
    %1 = arith.extui %0 : i1 to i32
    %c0_i32_0 = arith.constant 0 : i32
    %2 = arith.cmpi ne, %1, %c0_i32_0 : i32
    scf.if %2 {
      %cst_10 = arith.constant 0.000000e+00 : f32
      %12 = vector.broadcast %cst_10 : f32 to vector<512x64xf32>
      %c0_11 = arith.constant 0 : index
      %c0_12 = arith.constant 0 : index
      %13 = vector.load %arg8[%c0_11, %c0_12] : memref<512x64xf32, #tpu.memory_space<vmem>>, vector<512x64xf32>
      tpu.vector_store %arg8[%c0_11, %c0_12], %12 {strides = array<i32>} : memref<512x64xf32, #tpu.memory_space<vmem>>, vector<512x64xf32>,
    } else {
    }
    %c0 = arith.constant 0 : index
    %c0_1 = arith.constant 0 : index
    %3 = vector.load %arg8[%c0, %c0_1] : memref<512x64xf32, #tpu.memory_space<vmem>>, vector<512x64xf32>
    %c0_2 = arith.constant 0 : index
    %c0_3 = arith.constant 0 : index
    %4 = vector.load %arg3[%c0_2, %c0_3] : memref<512x147xbf16, #tpu.memory_space<vmem>>, vector<512x147xbf16>
    %c0_4 = arith.constant 0 : index
    %c0_5 = arith.constant 0 : index
    %5 = vector.load %arg4[%c0_4, %c0_5] : memref<147x64xbf16, #tpu.memory_space<vmem>>, vector<147x64xbf16>
    %cst = arith.constant dense<0.000000e+00> : vector<512x64xf32>
    %6 = tpu.matmul %4, %5, %cst {dimension_numbers = #tpu.dot_dimension_numbers<[1], [0], [0], [1], [0, 0, 1, 1], [], []>} : vector<512x147xbf16>, vector<147x64xbf16>, vector<512x64xf32> -> vector<512x64xf32>
    %7 = arith.addf %3, %6 : vector<512x64xf32>
    %c0_6 = arith.constant 0 : index
    %c0_7 = arith.constant 0 : index
    %8 = vector.load %arg8[%c0_6, %c0_7] : memref<512x64xf32, #tpu.memory_space<vmem>>, vector<512x64xf32>
    tpu.vector_store %arg8[%c0_6, %c0_7], %7 {strides = array<i32>} : memref<512x64xf32, #tpu.memory_space<vmem>>, vector<512x64xf32>,
    %c0_i32_8 = arith.constant 0 : i32
    %9 = arith.cmpi eq, %arg2, %c0_i32_8 : i32
    %10 = arith.extui %9 : i1 to i32
    %c0_i32_9 = arith.constant 0 : i32
    %11 = arith.cmpi ne, %10, %c0_i32_9 : i32
    scf.if %11 {
      %c0_10 = arith.constant 0 : index
      %c0_11 = arith.constant 0 : index
      %12 = vector.load %arg8[%c0_10, %c0_11] : memref<512x64xf32, #tpu.memory_space<vmem>>, vector<512x64xf32>
      %c0_12 = arith.constant 0 : index
      %c0_13 = arith.constant 0 : index
      %13 = vector.load %arg5[%c0_12, %c0_13] : memref<1x64xf32, #tpu.memory_space<vmem>>, vector<1x64xf32>
      %14 = vector.broadcast %13 : vector<1x64xf32> to vector<512x64xf32>
      %15 = arith.mulf %12, %14 : vector<512x64xf32>
      %c0_14 = arith.constant 0 : index
      %c0_15 = arith.constant 0 : index
      %16 = vector.load %arg6[%c0_14, %c0_15] : memref<1x64xf32, #tpu.memory_space<vmem>>, vector<1x64xf32>
      %17 = vector.broadcast %16 : vector<1x64xf32> to vector<512x64xf32>
      %18 = arith.addf %15, %17 : vector<512x64xf32>
      %cst_16 = arith.constant 0.000000e+00 : f32
      %19 = vector.broadcast %cst_16 : f32 to vector<512x64xf32>
      %20 = arith.maximumf %18, %19 : vector<512x64xf32>
      %c0_17 = arith.constant 0 : index
      %c0_18 = arith.constant 0 : index
      %21 = vector.load %arg7[%c0_17, %c0_18] : memref<512x64xf32, #tpu.memory_space<vmem>>, vector<512x64xf32>
      tpu.vector_store %arg7[%c0_17, %c0_18], %20 {strides = array<i32>} : memref<512x64xf32, #tpu.memory_space<vmem>>, vector<512x64xf32>,
    } else {
    }
    return
  }
  func.func @transform_0(%arg0: i32, %arg1: i32, %arg2: i32) -> (i32, i32) {
    %c0_i32 = arith.constant 0 : i32
    return %arg0, %arg2 : i32, i32
  }
  func.func @transform_1(%arg0: i32, %arg1: i32, %arg2: i32) -> (i32, i32) {
    %c0_i32 = arith.constant 0 : i32
    return %arg2, %arg1 : i32, i32
  }
  func.func @transform_2(%arg0: i32, %arg1: i32, %arg2: i32) -> (i32, i32) {
    %c0_i32 = arith.constant 0 : i32
    %c0_i32_0 = arith.constant 0 : i32
    return %c0_i32, %arg1 : i32, i32
  }
  func.func @transform_3(%arg0: i32, %arg1: i32, %arg2: i32) -> (i32, i32) {
    %c0_i32 = arith.constant 0 : i32
    %c0_i32_0 = arith.constant 0 : i32
    return %c0_i32, %arg1 : i32, i32
  }
  func.func @transform_4(%arg0: i32, %arg1: i32, %arg2: i32) -> (i32, i32) {
    %c0_i32 = arith.constant 0 : i32
    return %arg0, %arg1 : i32, i32
  }
}

</mosaic_0001>

<llo_original>
// kernel: pallas_matmul.1
$region0: #{pallas_matmul.1}
  #allocation0 [shape = 'u32[]', space=smem, size = 0x4, offset = 0x4, fixed_abs, tag = 'smem constant byte address 0x4 - core index']
  #allocation1 [shape = 'u32[72,128]{1,0:T(1,128)}', space=vmem, size = 0x9000, scoped, tag = 'internal scratch']
  #allocation2 [shape = 'f32[512,64]{1,0:T(8,128)}', space=vmem, size = 0x40000, scoped, tag = 'scratch operand']
  %s0 = inlined_call_operand.vmem [shape: bf16[512,147], index: 0, kind: input, shape index: {}]
  %s1 = inlined_call_operand.vmem [shape: bf16[147,64], index: 1, kind: input, shape index: {}]
  %s2 = inlined_call_operand.vmem [shape: f32[1,64], index: 2, kind: input, shape index: {}]
  %s3 = inlined_call_operand.vmem [shape: f32[1,64], index: 3, kind: input, shape index: {}]
  %s4 = inlined_call_operand.vmem [shape: f32[512,64], index: 4, kind: output, shape index: {}]
  %s5 = sld [smem:[#allocation0]]
  $region34: #{pallas_matmul.1} parent=0
    _
  %s7 = ssub.s32 1, %s5
  %s8 = scalar_select 0, %s7, %s5
  // Predicated region
  $region2: #{pallas_matmul.1} parent=0 // pred_check
    _
  $region3: #{pallas_matmul.1} parent=0 // pred_check_branch
    %10 = sbr.rel (0) target = $region5
  $region4: #{pallas_matmul.1} parent=0 // pred_region
    _
  $region5: #{pallas_matmul.1} parent=0 // pred_fallthru
    _
  // Predicated region
  $region6: #{pallas_matmul.1} parent=0 // pred_check
    _
  $region7: #{pallas_matmul.1} parent=0 // pred_check_branch
    %12 = sbr.rel (0) target = $region9
  $region8: #{pallas_matmul.1} parent=0 // pred_region
    _
  $region9: #{pallas_matmul.1} parent=0 // pred_fallthru
    _
  // Predicated region
  $region10: #{pallas_matmul.1} parent=0 // pred_check
    _
  $region11: #{pallas_matmul.1} parent=0 // pred_check_branch
    %14 = sbr.rel (0) target = $region13
  $region12: #{pallas_matmul.1} parent=0 // pred_region
    _
  $region13: #{pallas_matmul.1} parent=0 // pred_fallthru
    _
  // Predicated region
  $region14: #{pallas_matmul.1} parent=0 // pred_check
    _
  $region15: #{pallas_matmul.1} parent=0 // pred_check_branch
    %16 = sbr.rel (0) target = $region17
  $region16: #{pallas_matmul.1} parent=0 // pred_region
    _
  $region17: #{pallas_matmul.1} parent=0 // pred_fallthru
    _
  %p18 = scmp.eq.s32.totalorder 0, 0
  // Predicated region
  $region18: #{pallas_matmul.1} parent=0 // pred_check
    %p19 = pneg %p18
  $region19: #{pallas_matmul.1} parent=0 // pred_check_branch
    %21 = sbr.rel (%p19) target = $region21
  $region20: #{pallas_matmul.1} parent=0 // pred_region
    %vm22 = vcmask 523264
    %23 = vst.msk [vmem:[#allocation2] sm:$0xff] %vm22, 0.0
    %24 = vst.msk [vmem:[#allocation2 + $0x8] sm:$0xff] %vm22, 0.0
    %25 = vst.msk [vmem:[#allocation2 + $0x10] sm:$0xff] %vm22, 0.0
    %26 = vst.msk [vmem:[#allocation2 + $0x18] sm:$0xff] %vm22, 0.0
    %27 = vst.msk [vmem:[#allocation2 + $0x20] sm:$0xff] %vm22, 0.0
    %28 = vst.msk [vmem:[#allocation2 + $0x28] sm:$0xff] %vm22, 0.0
    %29 = vst.msk [vmem:[#allocation2 + $0x30] sm:$0xff] %vm22, 0.0
    %30 = vst.msk [vmem:[#allocation2 + $0x38] sm:$0xff] %vm22, 0.0
    %31 = vst.msk [vmem:[#allocation2 + $0x40] sm:$0xff] %vm22, 0.0
    %32 = vst.msk [vmem:[#allocation2 + $0x48] sm:$0xff] %vm22, 0.0
    %33 = vst.msk [vmem:[#allocation2 + $0x50] sm:$0xff] %vm22, 0.0
    %34 = vst.msk [vmem:[#allocation2 + $0x58] sm:$0xff] %vm22, 0.0
    %35 = vst.msk [vmem:[#allocation2 + $0x60] sm:$0xff] %vm22, 0.0
    %36 = vst.msk [vmem:[#allocation2 + $0x68] sm:$0xff] %vm22, 0.0
    %37 = vst.msk [vmem:[#allocation2 + $0x70] sm:$0xff] %vm22, 0.0
    %38 = vst.msk [vmem:[#allocation2 + $0x78] sm:$0xff] %vm22, 0.0
    %39 = vst.msk [vmem:[#allocation2 + $0x80] sm:$0xff] %vm22, 0.0
    %40 = vst.msk [vmem:[#allocation2 + $0x88] sm:$0xff] %vm22, 0.0
    %41 = vst.msk [vmem:[#allocation2 + $0x90] sm:$0xff] %vm22, 0.0
    %42 = vst.msk [vmem:[#allocation2 + $0x98] sm:$0xff] %vm22, 0.0
    %43 = vst.msk [vmem:[#allocation2 + $0xa0] sm:$0xff] %vm22, 0.0
    %44 = vst.msk [vmem:[#allocation2 + $0xa8] sm:$0xff] %vm22, 0.0
    %45 = vst.msk [vmem:[#allocation2 + $0xb0] sm:$0xff] %vm22, 0.0
    %46 = vst.msk [vmem:[#allocation2 + $0xb8] sm:$0xff] %vm22, 0.0
    %47 = vst.msk [vmem:[#allocation2 + $0xc0] sm:$0xff] %vm22, 0.0
    %48 = vst.msk [vmem:[#allocation2 + $0xc8] sm:$0xff] %vm22, 0.0
    %49 = vst.msk [vmem:[#allocation2 + $0xd0] sm:$0xff] %vm22, 0.0
    %50 = vst.msk [vmem:[#allocation2 + $0xd8] sm:$0xff] %vm22, 0.0
    %51 = vst.msk [vmem:[#allocation2 + $0xe0] sm:$0xff] %vm22, 0.0
    %52 = vst.msk [vmem:[#allocation2 + $0xe8] sm:$0xff] %vm22, 0.0
    %53 = vst.msk [vmem:[#allocation2 + $0xf0] sm:$0xff] %vm22, 0.0
    %54 = vst.msk [vmem:[#allocation2 + $0xf8] sm:$0xff] %vm22, 0.0
    %55 = vst.msk [vmem:[#allocation2 + $0x100] sm:$0xff] %vm22, 0.0
    %56 = vst.msk [vmem:[#allocation2 + $0x108] sm:$0xff] %vm22, 0.0
    %57 = vst.msk [vmem:[#allocation2 + $0x110] sm:$0xff] %vm22, 0.0
    %58 = vst.msk [vmem:[#allocation2 + $0x118] sm:$0xff] %vm22, 0.0
    %59 = vst.msk [vmem:[#allocation2 + $0x120] sm:$0xff] %vm22, 0.0
    %60 = vst.msk [vmem:[#allocation2 + $0x128] sm:$0xff] %vm22, 0.0
    %61 = vst.msk [vmem:[#allocation2 + $0x130] sm:$0xff] %vm22, 0.0
    %62 = vst.msk [vmem:[#allocation2 + $0x138] sm:$0xff] %vm22, 0.0
    %63 = vst.msk [vmem:[#allocation2 + $0x140] sm:$0xff] %vm22, 0.0
    %64 = vst.msk [vmem:[#allocation2 + $0x148] sm:$0xff] %vm22, 0.0
    %65 = vst.msk [vmem:[#allocation2 + $0x150] sm:$0xff] %vm22, 0.0
    %66 = vst.msk [vmem:[#allocation2 + $0x158] sm:$0xff] %vm22, 0.0
    %67 = vst.msk [vmem:[#allocation2 + $0x160] sm:$0xff] %vm22, 0.0
    %68 = vst.msk [vmem:[#allocation2 + $0x168] sm:$0xff] %vm22, 0.0
    %69 = vst.msk [vmem:[#allocation2 + $0x170] sm:$0xff] %vm22, 0.0
    %70 = vst.msk [vmem:[#allocation2 + $0x178] sm:$0xff] %vm22, 0.0
    %71 = vst.msk [vmem:[#allocation2 + $0x180] sm:$0xff] %vm22, 0.0
    %72 = vst.msk [vmem:[#allocation2 + $0x188] sm:$0xff] %vm22, 0.0
    %73 = vst.msk [vmem:[#allocation2 + $0x190] sm:$0xff] %vm22, 0.0
    %74 = vst.msk [vmem:[#allocation2 + $0x198] sm:$0xff] %vm22, 0.0
    %75 = vst.msk [vmem:[#allocation2 + $0x1a0] sm:$0xff] %vm22, 0.0
    %76 = vst.msk [vmem:[#allocation2 + $0x1a8] sm:$0xff] %vm22, 0.0
    %77 = vst.msk [vmem:[#allocation2 + $0x1b0] sm:$0xff] %vm22, 0.0
    %78 = vst.msk [vmem:[#allocation2 + $0x1b8] sm:$0xff] %vm22, 0.0
    %79 = vst.msk [vmem:[#allocation2 + $0x1c0] sm:$0xff] %vm22, 0.0
    %80 = vst.msk [vmem:[#allocation2 + $0x1c8] sm:$0xff] %vm22, 0.0
    %81 = vst.msk [vmem:[#allocation2 + $0x1d0] sm:$0xff] %vm22, 0.0
    %82 = vst.msk [vmem:[#allocation2 + $0x1d8] sm:$0xff] %vm22, 0.0
    %83 = vst.msk [vmem:[#allocation2 + $0x1e0] sm:$0xff] %vm22, 0.0
    %84 = vst.msk [vmem:[#allocation2 + $0x1e8] sm:$0xff] %vm22, 0.0
    %85 = vst.msk [vmem:[#allocation2 + $0x1f0] sm:$0xff] %vm22, 0.0
    %86 = vst.msk [vmem:[#allocation2 + $0x1f8] sm:$0xff] %vm22, 0.0
  $region21: #{pallas_matmul.1} parent=0 // pred_fallthru
    _
  %v87 = vld [vmem:[#allocation2] sm:$0xff]
  %v88 = vld [vmem:[#allocation2 + $0x8] sm:$0xff]
  %v89 = vld [vmem:[#allocation2 + $0x10] sm:$0xff]
  %v90 = vld [vmem:[#allocation2 + $0x18] sm:$0xff]
  %v91 = vld [vmem:[#allocation2 + $0x20] sm:$0xff]
  %v92 = vld [vmem:[#allocation2 + $0x28] sm:$0xff]
  %v93 = vld [vmem:[#allocation2 + $0x30] sm:$0xff]
  %v94 = vld [vmem:[#allocation2 + $0x38] sm:$0xff]
  %v95 = vld [vmem:[#allocation2 + $0x40] sm:$0xff]
  %v96 = vld [vmem:[#allocation2 + $0x48] sm:$0xff]
  %v97 = vld [vmem:[#allocation2 + $0x50] sm:$0xff]
  %v98 = vld [vmem:[#allocation2 + $0x58] sm:$0xff]
  %v99 = vld [vmem:[#allocation2 + $0x60] sm:$0xff]
  %v100 = vld [vmem:[#allocation2 + $0x68] sm:$0xff]
  %v101 = vld [vmem:[#allocation2 + $0x70] sm:$0xff]
  %v102 = vld [vmem:[#allocation2 + $0x78] sm:$0xff]
  %v103 = vld [vmem:[#allocation2 + $0x80] sm:$0xff]
  %v104 = vld [vmem:[#allocation2 + $0x88] sm:$0xff]
  %v105 = vld [vmem:[#allocation2 + $0x90] sm:$0xff]
  %v106 = vld [vmem:[#allocation2 + $0x98] sm:$0xff]
  %v107 = vld [vmem:[#allocation2 + $0xa0] sm:$0xff]
  %v108 = vld [vmem:[#allocation2 + $0xa8] sm:$0xff]
  %v109 = vld [vmem:[#allocation2 + $0xb0] sm:$0xff]
  %v110 = vld [vmem:[#allocation2 + $0xb8] sm:$0xff]
  %v111 = vld [vmem:[#allocation2 + $0xc0] sm:$0xff]
  %v112 = vld [vmem:[#allocation2 + $0xc8] sm:$0xff]
  %v113 = vld [vmem:[#allocation2 + $0xd0] sm:$0xff]
  %v114 = vld [vmem:[#allocation2 + $0xd8] sm:$0xff]
  %v115 = vld [vmem:[#allocation2 + $0xe0] sm:$0xff]
  %v116 = vld [vmem:[#allocation2 + $0xe8] sm:$0xff]
  %v117 = vld [vmem:[#allocation2 + $0xf0] sm:$0xff]
  %v118 = vld [vmem:[#allocation2 + $0xf8] sm:$0xff]
  %v119 = vld [vmem:[#allocation2 + $0x100] sm:$0xff]
  %v120 = vld [vmem:[#allocation2 + $0x108] sm:$0xff]
  %v121 = vld [vmem:[#allocation2 + $0x110] sm:$0xff]
  %v122 = vld [vmem:[#allocation2 + $0x118] sm:$0xff]
  %v123 = vld [vmem:[#allocation2 + $0x120] sm:$0xff]
  %v124 = vld [vmem:[#allocation2 + $0x128] sm:$0xff]
  %v125 = vld [vmem:[#allocation2 + $0x130] sm:$0xff]
  %v126 = vld [vmem:[#allocation2 + $0x138] sm:$0xff]
  %v127 = vld [vmem:[#allocation2 + $0x140] sm:$0xff]
  %v128 = vld [vmem:[#allocation2 + $0x148] sm:$0xff]
  %v129 = vld [vmem:[#allocation2 + $0x150] sm:$0xff]
  %v130 = vld [vmem:[#allocation2 + $0x158] sm:$0xff]
  %v131 = vld [vmem:[#allocation2 + $0x160] sm:$0xff]
  %v132 = vld [vmem:[#allocation2 + $0x168] sm:$0xff]
  %v133 = vld [vmem:[#allocation2 + $0x170] sm:$0xff]
  %v134 = vld [vmem:[#allocation2 + $0x178] sm:$0xff]
  %v135 = vld [vmem:[#allocation2 + $0x180] sm:$0xff]
  %v136 = vld [vmem:[#allocation2 + $0x188] sm:$0xff]
  %v137 = vld [vmem:[#allocation2 + $0x190] sm:$0xff]
  %v138 = vld [vmem:[#allocation2 + $0x198] sm:$0xff]
  %v139 = vld [vmem:[#allocation2 + $0x1a0] sm:$0xff]
  %v140 = vld [vmem:[#allocation2 + $0x1a8] sm:$0xff]
  %v141 = vld [vmem:[#allocation2 + $0x1b0] sm:$0xff]
  %v142 = vld [vmem:[#allocation2 + $0x1b8] sm:$0xff]
  %v143 = vld [vmem:[#allocation2 + $0x1c0] sm:$0xff]
  %v144 = vld [vmem:[#allocation2 + $0x1c8] sm:$0xff]
  %v145 = vld [vmem:[#allocation2 + $0x1d0] sm:$0xff]
  %v146 = vld [vmem:[#allocation2 + $0x1d8] sm:$0xff]
  %v147 = vld [vmem:[#allocation2 + $0x1e0] sm:$0xff]
  %v148 = vld [vmem:[#allocation2 + $0x1e8] sm:$0xff]
  %v149 = vld [vmem:[#allocation2 + $0x1f0] sm:$0xff]
  %v150 = vld [vmem:[#allocation2 + $0x1f8] sm:$0xff]
  %v151 = vld [vmem:[%s0] sm:$0xff]
  %v152 = vld [vmem:[%s0 + $0x8] sm:$0xff]
  %v153 = vld [vmem:[%s0 + $0x10] sm:$0xff]
  %v154 = vld [vmem:[%s0 + $0x18] sm:$0xff]
  %v155 = vld [vmem:[%s0 + $0x20] sm:$0xff]
  %v156 = vld [vmem:[%s0 + $0x28] sm:$0xff]
  %v157 = vld [vmem:[%s0 + $0x30] sm:$0xff]
  %v158 = vld [vmem:[%s0 + $0x38] sm:$0xff]
  %v159 = vld [vmem:[%s0 + $0x40] sm:$0xff]
  %v160 = vld [vmem:[%s0 + $0x48] sm:$0xff]
  %v161 = vld [vmem:[%s0 + $0x50] sm:$0xff]
  %v162 = vld [vmem:[%s0 + $0x58] sm:$0xff]
  %v163 = vld [vmem:[%s0 + $0x60] sm:$0xff]
  %v164 = vld [vmem:[%s0 + $0x68] sm:$0xff]
  %v165 = vld [vmem:[%s0 + $0x70] sm:$0xff]
  %v166 = vld [vmem:[%s0 + $0x78] sm:$0xff]
  %v167 = vld [vmem:[%s0 + $0x80] sm:$0xff]
  %v168 = vld [vmem:[%s0 + $0x88] sm:$0xff]
  %v169 = vld [vmem:[%s0 + $0x90] sm:$0xff]
  %v170 = vld [vmem:[%s0 + $0x98] sm:$0xff]
  %v171 = vld [vmem:[%s0 + $0xa0] sm:$0xff]
  %v172 = vld [vmem:[%s0 + $0xa8] sm:$0xff]
  %v173 = vld [vmem:[%s0 + $0xb0] sm:$0xff]
  %v174 = vld [vmem:[%s0 + $0xb8] sm:$0xff]
  %v175 = vld [vmem:[%s0 + $0xc0] sm:$0xff]
  %v176 = vld [vmem:[%s0 + $0xc8] sm:$0xff]
  %v177 = vld [vmem:[%s0 + $0xd0] sm:$0xff]
  %v178 = vld [vmem:[%s0 + $0xd8] sm:$0xff]
  %v179 = vld [vmem:[%s0 + $0xe0] sm:$0xff]
  %v180 = vld [vmem:[%s0 + $0xe8] sm:$0xff]
  %v181 = vld [vmem:[%s0 + $0xf0] sm:$0xff]
  %v182 = vld [vmem:[%s0 + $0xf8] sm:$0xff]
  %v183 = vld [vmem:[%s0 + $0x100] sm:$0xff]
  %v184 = vld [vmem:[%s0 + $0x108] sm:$0xff]
  %v185 = vld [vmem:[%s0 + $0x110] sm:$0xff]
  %v186 = vld [vmem:[%s0 + $0x118] sm:$0xff]
  %v187 = vld [vmem:[%s0 + $0x120] sm:$0xff]
  %v188 = vld [vmem:[%s0 + $0x128] sm:$0xff]
  %v189 = vld [vmem:[%s0 + $0x130] sm:$0xff]
  %v190 = vld [vmem:[%s0 + $0x138] sm:$0xff]
  %v191 = vld [vmem:[%s0 + $0x140] sm:$0xff]
  %v192 = vld [vmem:[%s0 + $0x148] sm:$0xff]
  %v193 = vld [vmem:[%s0 + $0x150] sm:$0xff]
  %v194 = vld [vmem:[%s0 + $0x158] sm:$0xff]
  %v195 = vld [vmem:[%s0 + $0x160] sm:$0xff]
  %v196 = vld [vmem:[%s0 + $0x168] sm:$0xff]
  %v197 = vld [vmem:[%s0 + $0x170] sm:$0xff]
  %v198 = vld [vmem:[%s0 + $0x178] sm:$0xff]
  %v199 = vld [vmem:[%s0 + $0x180] sm:$0xff]
  %v200 = vld [vmem:[%s0 + $0x188] sm:$0xff]
  %v201 = vld [vmem:[%s0 + $0x190] sm:$0xff]
  %v202 = vld [vmem:[%s0 + $0x198] sm:$0xff]
  %v203 = vld [vmem:[%s0 + $0x1a0] sm:$0xff]
  %v204 = vld [vmem:[%s0 + $0x1a8] sm:$0xff]
  %v205 = vld [vmem:[%s0 + $0x1b0] sm:$0xff]
  %v206 = vld [vmem:[%s0 + $0x1b8] sm:$0xff]
  %v207 = vld [vmem:[%s0 + $0x1c0] sm:$0xff]
  %v208 = vld [vmem:[%s0 + $0x1c8] sm:$0xff]
  %v209 = vld [vmem:[%s0 + $0x1d0] sm:$0xff]
  %v210 = vld [vmem:[%s0 + $0x1d8] sm:$0xff]
  %v211 = vld [vmem:[%s0 + $0x1e0] sm:$0xff]
  %v212 = vld [vmem:[%s0 + $0x1e8] sm:$0xff]
  %v213 = vld [vmem:[%s0 + $0x1f0] sm:$0xff]
  %v214 = vld [vmem:[%s0 + $0x1f8] sm:$0xff]
  %v215 = vld [vmem:[%s1] sm:$0xf]
  %v216 = vld [vmem:[%s1 + $0x4] sm:$0xf]
  %v217 = vld [vmem:[%s1 + $0x8] sm:$0xf]
  %v218 = vld [vmem:[%s1 + $0xc] sm:$0xf]
  %v219 = vld [vmem:[%s1 + $0x10] sm:$0xf]
  %v220 = vld [vmem:[%s1 + $0x14] sm:$0xf]
  %v221 = vld [vmem:[%s1 + $0x18] sm:$0xf]
  %v222 = vld [vmem:[%s1 + $0x1c] sm:$0xf]
  %v223 = vld [vmem:[%s1 + $0x20] sm:$0xf]
  %v224 = vld [vmem:[%s1 + $0x24] sm:$0xf]
  %v225 = vld [vmem:[%s1 + $0x28] sm:$0xf]
  %v226 = vld [vmem:[%s1 + $0x2c] sm:$0xf]
  %v227 = vld [vmem:[%s1 + $0x30] sm:$0xf]
  %v228 = vld [vmem:[%s1 + $0x34] sm:$0xf]
  %v229 = vld [vmem:[%s1 + $0x38] sm:$0xf]
  %v230 = vld [vmem:[%s1 + $0x3c] sm:$0xf]
  %v231 = vld [vmem:[%s1 + $0x40] sm:$0xf]
  %v232 = vld [vmem:[%s1 + $0x44] sm:$0xf]
  %v233 = vld [vmem:[%s1 + $0x48] sm:$0x3]
  %v298 = vunpack.c.l.b16 %v151
  %v299 = vunpack.c.h.b16 %v151
  %v300 = vunpack.c.l.b16 %v152
  %v301 = vunpack.c.h.b16 %v152
  %v302 = vunpack.c.l.b16 %v153
  %v303 = vunpack.c.h.b16 %v153
  %v304 = vunpack.c.l.b16 %v154
  %v305 = vunpack.c.h.b16 %v154
  %v306 = vunpack.c.l.b16 %v155
  %v307 = vunpack.c.h.b16 %v155
  %v308 = vunpack.c.l.b16 %v156
  %v309 = vunpack.c.h.b16 %v156
  %v310 = vunpack.c.l.b16 %v157
  %v311 = vunpack.c.h.b16 %v157
  %v312 = vunpack.c.l.b16 %v158
  %v313 = vunpack.c.h.b16 %v158
  %v314 = vunpack.c.l.b16 %v159
  %v315 = vunpack.c.h.b16 %v159
  %v316 = vunpack.c.l.b16 %v160
  %v317 = vunpack.c.h.b16 %v160
  %v318 = vunpack.c.l.b16 %v161
  %v319 = vunpack.c.h.b16 %v161
  %v320 = vunpack.c.l.b16 %v162
  %v321 = vunpack.c.h.b16 %v162
  %v322 = vunpack.c.l.b16 %v163
  %v323 = vunpack.c.h.b16 %v163
  %v324 = vunpack.c.l.b16 %v164
  %v325 = vunpack.c.h.b16 %v164
  %v326 = vunpack.c.l.b16 %v165
  %v327 = vunpack.c.h.b16 %v165
  %v328 = vunpack.c.l.b16 %v166
  %v329 = vunpack.c.h.b16 %v166
  %v330 = vunpack.c.l.b16 %v167
  %v331 = vunpack.c.h.b16 %v167
  %v332 = vunpack.c.l.b16 %v168
  %v333 = vunpack.c.h.b16 %v168
  %v334 = vunpack.c.l.b16 %v169
  %v335 = vunpack.c.h.b16 %v169
  %v336 = vunpack.c.l.b16 %v170
  %v337 = vunpack.c.h.b16 %v170
  %v338 = vunpack.c.l.b16 %v171
  %v339 = vunpack.c.h.b16 %v171
  %v340 = vunpack.c.l.b16 %v172
  %v341 = vunpack.c.h.b16 %v172
  %v342 = vunpack.c.l.b16 %v173
  %v343 = vunpack.c.h.b16 %v173
  %v344 = vunpack.c.l.b16 %v174
  %v345 = vunpack.c.h.b16 %v174
  %v346 = vunpack.c.l.b16 %v175
  %v347 = vunpack.c.h.b16 %v175
  %v348 = vunpack.c.l.b16 %v176
  %v349 = vunpack.c.h.b16 %v176
  %v350 = vunpack.c.l.b16 %v177
  %v351 = vunpack.c.h.b16 %v177
  %v352 = vunpack.c.l.b16 %v178
  %v353 = vunpack.c.h.b16 %v178
  %v354 = vunpack.c.l.b16 %v179
  %v355 = vunpack.c.h.b16 %v179
  %v356 = vunpack.c.l.b16 %v180
  %v357 = vunpack.c.h.b16 %v180
  %v358 = vunpack.c.l.b16 %v181
  %v359 = vunpack.c.h.b16 %v181
  %v360 = vunpack.c.l.b16 %v182
  %v361 = vunpack.c.h.b16 %v182
  %v362 = vunpack.c.l.b16 %v183
  %v363 = vunpack.c.h.b16 %v183
  %v364 = vunpack.c.l.b16 %v184
  %v365 = vunpack.c.h.b16 %v184
  %v366 = vunpack.c.l.b16 %v185
  %v367 = vunpack.c.h.b16 %v185
  %v368 = vunpack.c.l.b16 %v186
  %v369 = vunpack.c.h.b16 %v186
  %v370 = vunpack.c.l.b16 %v187
  %v371 = vunpack.c.h.b16 %v187
  %v372 = vunpack.c.l.b16 %v188
  %v373 = vunpack.c.h.b16 %v188
  %v374 = vunpack.c.l.b16 %v189
  %v375 = vunpack.c.h.b16 %v189
  %v376 = vunpack.c.l.b16 %v190
  %v377 = vunpack.c.h.b16 %v190
  %v378 = vunpack.c.l.b16 %v191
  %v379 = vunpack.c.h.b16 %v191
  %v380 = vunpack.c.l.b16 %v192
  %v381 = vunpack.c.h.b16 %v192
  %v382 = vunpack.c.l.b16 %v193
  %v383 = vunpack.c.h.b16 %v193
  %v384 = vunpack.c.l.b16 %v194
  %v385 = vunpack.c.h.b16 %v194
  %v386 = vunpack.c.l.b16 %v195
  %v387 = vunpack.c.h.b16 %v195
  %v388 = vunpack.c.l.b16 %v196
  %v389 = vunpack.c.h.b16 %v196
  %v390 = vunpack.c.l.b16 %v197
  %v391 = vunpack.c.h.b16 %v197
  %v392 = vunpack.c.l.b16 %v198
  %v393 = vunpack.c.h.b16 %v198
  %v394 = vunpack.c.l.b16 %v199
  %v395 = vunpack.c.h.b16 %v199
  %v396 = vunpack.c.l.b16 %v200
  %v397 = vunpack.c.h.b16 %v200
  %v398 = vunpack.c.l.b16 %v201
  %v399 = vunpack.c.h.b16 %v201
  %v400 = vunpack.c.l.b16 %v202
  %v401 = vunpack.c.h.b16 %v202
  %v402 = vunpack.c.l.b16 %v203
  %v403 = vunpack.c.h.b16 %v203
  %v404 = vunpack.c.l.b16 %v204
  %v405 = vunpack.c.h.b16 %v204
  %v406 = vunpack.c.l.b16 %v205
  %v407 = vunpack.c.h.b16 %v205
  %v408 = vunpack.c.l.b16 %v206
  %v409 = vunpack.c.h.b16 %v206
  %v410 = vunpack.c.l.b16 %v207
  %v411 = vunpack.c.h.b16 %v207
  %v412 = vunpack.c.l.b16 %v208
  %v413 = vunpack.c.h.b16 %v208
  %v414 = vunpack.c.l.b16 %v209
  %v415 = vunpack.c.h.b16 %v209
  %v416 = vunpack.c.l.b16 %v210
  %v417 = vunpack.c.h.b16 %v210
  %v418 = vunpack.c.l.b16 %v211
  %v419 = vunpack.c.h.b16 %v211
  %v420 = vunpack.c.l.b16 %v212
  %v421 = vunpack.c.h.b16 %v212
  %v422 = vunpack.c.l.b16 %v213
  %v423 = vunpack.c.h.b16 %v213
  %v424 = vunpack.c.l.b16 %v214
  %v425 = vunpack.c.h.b16 %v214
  %v426 = vpack.c.b16 %v300, %v298
  %v427 = vpack.c.b16 %v301, %v299
  %v428 = vpack.c.b16 %v304, %v302
  %v429 = vpack.c.b16 %v305, %v303
  %v430 = vpack.c.b16 %v308, %v306
  %v431 = vpack.c.b16 %v309, %v307
  %v432 = vpack.c.b16 %v312, %v310
  %v433 = vpack.c.b16 %v313, %v311
  %v434 = vpack.c.b16 %v316, %v314
  %v435 = vpack.c.b16 %v317, %v315
  %v436 = vpack.c.b16 %v320, %v318
  %v437 = vpack.c.b16 %v321, %v319
  %v438 = vpack.c.b16 %v324, %v322
  %v439 = vpack.c.b16 %v325, %v323
  %v440 = vpack.c.b16 %v328, %v326
  %v441 = vpack.c.b16 %v329, %v327
  %v442 = vpack.c.b16 %v332, %v330
  %v443 = vpack.c.b16 %v333, %v331
  %v444 = vpack.c.b16 %v336, %v334
  %v445 = vpack.c.b16 %v337, %v335
  %v446 = vpack.c.b16 %v340, %v338
  %v447 = vpack.c.b16 %v341, %v339
  %v448 = vpack.c.b16 %v344, %v342
  %v449 = vpack.c.b16 %v345, %v343
  %v450 = vpack.c.b16 %v348, %v346
  %v451 = vpack.c.b16 %v349, %v347
  %v452 = vpack.c.b16 %v352, %v350
  %v453 = vpack.c.b16 %v353, %v351
  %v454 = vpack.c.b16 %v356, %v354
  %v455 = vpack.c.b16 %v357, %v355
  %v456 = vpack.c.b16 %v360, %v358
  %v457 = vpack.c.b16 %v361, %v359
  %v458 = vpack.c.b16 %v364, %v362
  %v459 = vpack.c.b16 %v365, %v363
  %v460 = vpack.c.b16 %v368, %v366
  %v461 = vpack.c.b16 %v369, %v367
  %v462 = vpack.c.b16 %v372, %v370
  %v463 = vpack.c.b16 %v373, %v371
  %v464 = vpack.c.b16 %v376, %v374
  %v465 = vpack.c.b16 %v377, %v375
  %v466 = vpack.c.b16 %v380, %v378
  %v467 = vpack.c.b16 %v381, %v379
  %v468 = vpack.c.b16 %v384, %v382
  %v469 = vpack.c.b16 %v385, %v383
  %v470 = vpack.c.b16 %v388, %v386
  %v471 = vpack.c.b16 %v389, %v387
  %v472 = vpack.c.b16 %v392, %v390
  %v473 = vpack.c.b16 %v393, %v391
  %v474 = vpack.c.b16 %v396, %v394
  %v475 = vpack.c.b16 %v397, %v395
  %v476 = vpack.c.b16 %v400, %v398
  %v477 = vpack.c.b16 %v401, %v399
  %v478 = vpack.c.b16 %v404, %v402
  %v479 = vpack.c.b16 %v405, %v403
  %v480 = vpack.c.b16 %v408, %v406
  %v481 = vpack.c.b16 %v409, %v407
  %v482 = vpack.c.b16 %v412, %v410
  %v483 = vpack.c.b16 %v413, %v411
  %v484 = vpack.c.b16 %v416, %v414
  %v485 = vpack.c.b16 %v417, %v415
  %v486 = vpack.c.b16 %v420, %v418
  %v487 = vpack.c.b16 %v421, %v419
  %v488 = vpack.c.b16 %v424, %v422
  %v489 = vpack.c.b16 %v425, %v423
  %v541 = vunpack.c.l.b16 %v215
  %v542 = vunpack.c.l.b16 %v216
  %v543 = vunpack.c.l.b16 %v217
  %v544 = vunpack.c.l.b16 %v218
  %v545 = vunpack.c.l.b16 %v219
  %v546 = vunpack.c.l.b16 %v220
  %v547 = vunpack.c.l.b16 %v221
  %v548 = vunpack.c.l.b16 %v222
  %v549 = vunpack.c.l.b16 %v223
  %v550 = vunpack.c.l.b16 %v224
  %v551 = vunpack.c.l.b16 %v225
  %v552 = vunpack.c.l.b16 %v226
  %v553 = vunpack.c.l.b16 %v227
  %v554 = vunpack.c.l.b16 %v228
  %v555 = vunpack.c.l.b16 %v229
  %v556 = vunpack.c.l.b16 %v230
  %v557 = vunpack.c.l.b16 %v231
  %v558 = vunpack.c.l.b16 %v232
  %v559 = vunpack.c.l.b16 %v233
  %v560 = vpack.c.b16 %v542, %v541
  %v561 = vpack.c.b16 %v544, %v543
  %v562 = vpack.c.b16 %v546, %v545
  %v563 = vpack.c.b16 %v548, %v547
  %v564 = vpack.c.b16 %v550, %v549
  %v565 = vpack.c.b16 %v552, %v551
  %v566 = vpack.c.b16 %v554, %v553
  %v567 = vpack.c.b16 %v556, %v555
  %v568 = vpack.c.b16 %v558, %v557
  %v569 = vpack.c.b16 %v559, %v559
  %vm579 = vcmask 154624
  %v581 = vsel %vm579, %v427, 0
  %v584 = vsel %vm579, %v429, 0
  %v587 = vsel %vm579, %v431, 0
  %v590 = vsel %vm579, %v433, 0
  %v593 = vsel %vm579, %v435, 0
  %v596 = vsel %vm579, %v437, 0
  %v599 = vsel %vm579, %v439, 0
  %v602 = vsel %vm579, %v441, 0
  %v605 = vsel %vm579, %v443, 0
  %v608 = vsel %vm579, %v445, 0
  %v611 = vsel %vm579, %v447, 0
  %v614 = vsel %vm579, %v449, 0
  %v617 = vsel %vm579, %v451, 0
  %v620 = vsel %vm579, %v453, 0
  %v623 = vsel %vm579, %v455, 0
  %v626 = vsel %vm579, %v457, 0
  %v629 = vsel %vm579, %v459, 0
  %v632 = vsel %vm579, %v461, 0
  %v635 = vsel %vm579, %v463, 0
  %v638 = vsel %vm579, %v465, 0
  %v641 = vsel %vm579, %v467, 0
  %v644 = vsel %vm579, %v469, 0
  %v647 = vsel %vm579, %v471, 0
  %v650 = vsel %vm579, %v473, 0
  %v653 = vsel %vm579, %v475, 0
  %v656 = vsel %vm579, %v477, 0
  %v659 = vsel %vm579, %v479, 0
  %v662 = vsel %vm579, %v481, 0
  %v665 = vsel %vm579, %v483, 0
  %v668 = vsel %vm579, %v485, 0
  %v671 = vsel %vm579, %v487, 0
  %v674 = vsel %vm579, %v489, 0
  %vm676 = vcmask 1040384
  %vm677 = vcmask 1041408
  %v678 = vsel %vm676, 4294967295, 65535
  %v679 = vsel %vm677, %v678, 0
  %v681 = vand.u32 %v569, %v679
  %683 = vmatpush.bf16.msra.mxu0 %v567
  %684 = vmatpush.bf16.msra.mxu0 %v566
  %685 = vmatpush.bf16.msra.mxu0 %v565
  %686 = vmatpush.bf16.msra.mxu0 %v564
  %687 = vmatpush.bf16.msra.mxu0 %v563
  %688 = vmatpush.bf16.msra.mxu0 %v562
  %689 = vmatpush.bf16.msra.mxu0 %v561
  %690 = vmatpush.bf16.msra.mxu0 %v560
  %691 = vmatmul.bf16.gmra.mxu0 %v426
  %v692 = vpop.f32.mrf.mxu0
  %v693 = vadd.f32 0.0, %v692
  %v694 = vpop.f32.mrf.mxu0
  %v695 = vadd.f32 0.0, %v694
  %696 = vmatmul.bf16.gmra.mxu0 %v428
  %v697 = vpop.f32.mrf.mxu0
  %v698 = vadd.f32 0.0, %v697
  %v699 = vpop.f32.mrf.mxu0
  %v700 = vadd.f32 0.0, %v699
  %701 = vmatmul.bf16.gmra.mxu0 %v430
  %v702 = vpop.f32.mrf.mxu0
  %v703 = vadd.f32 0.0, %v702
  %v704 = vpop.f32.mrf.mxu0
  %v705 = vadd.f32 0.0, %v704
  %706 = vmatmul.bf16.gmra.mxu0 %v432
  %v707 = vpop.f32.mrf.mxu0
  %v708 = vadd.f32 0.0, %v707
  %v709 = vpop.f32.mrf.mxu0
  %v710 = vadd.f32 0.0, %v709
  %711 = vmatmul.bf16.gmra.mxu0 %v434
  %v712 = vpop.f32.mrf.mxu0
  %v713 = vadd.f32 0.0, %v712
  %v714 = vpop.f32.mrf.mxu0
  %v715 = vadd.f32 0.0, %v714
  %716 = vmatmul.bf16.gmra.mxu0 %v436
  %v717 = vpop.f32.mrf.mxu0
  %v718 = vadd.f32 0.0, %v717
  %v719 = vpop.f32.mrf.mxu0
  %v720 = vadd.f32 0.0, %v719
  %721 = vmatmul.bf16.gmra.mxu0 %v438
  %v722 = vpop.f32.mrf.mxu0
  %v723 = vadd.f32 0.0, %v722
  %v724 = vpop.f32.mrf.mxu0
  %v725 = vadd.f32 0.0, %v724
  %726 = vmatmul.bf16.gmra.mxu0 %v440
  %v727 = vpop.f32.mrf.mxu0
  %v728 = vadd.f32 0.0, %v727
  %v729 = vpop.f32.mrf.mxu0
  %v730 = vadd.f32 0.0, %v729
  %731 = vmatmul.bf16.gmra.mxu0 %v442
  %v732 = vpop.f32.mrf.mxu0
  %v733 = vadd.f32 0.0, %v732
  %v734 = vpop.f32.mrf.mxu0
  %v735 = vadd.f32 0.0, %v734
  %736 = vmatmul.bf16.gmra.mxu0 %v444
  %v737 = vpop.f32.mrf.mxu0
  %v738 = vadd.f32 0.0, %v737
  %v739 = vpop.f32.mrf.mxu0
  %v740 = vadd.f32 0.0, %v739
  %741 = vmatmul.bf16.gmra.mxu0 %v446
  %v742 = vpop.f32.mrf.mxu0
  %v743 = vadd.f32 0.0, %v742
  %v744 = vpop.f32.mrf.mxu0
  %v745 = vadd.f32 0.0, %v744
  %746 = vmatmul.bf16.gmra.mxu0 %v448
  %v747 = vpop.f32.mrf.mxu0
  %v748 = vadd.f32 0.0, %v747
  %v749 = vpop.f32.mrf.mxu0
  %v750 = vadd.f32 0.0, %v749
  %751 = vmatmul.bf16.gmra.mxu0 %v450
  %v752 = vpop.f32.mrf.mxu0
  %v753 = vadd.f32 0.0, %v752
  %v754 = vpop.f32.mrf.mxu0
  %v755 = vadd.f32 0.0, %v754
  %756 = vmatmul.bf16.gmra.mxu0 %v452
  %v757 = vpop.f32.mrf.mxu0
  %v758 = vadd.f32 0.0, %v757
  %v759 = vpop.f32.mrf.mxu0
  %v760 = vadd.f32 0.0, %v759
  %761 = vmatmul.bf16.gmra.mxu0 %v454
  %v762 = vpop.f32.mrf.mxu0
  %v763 = vadd.f32 0.0, %v762
  %v764 = vpop.f32.mrf.mxu0
  %v765 = vadd.f32 0.0, %v764
  %766 = vmatmul.bf16.gmra.mxu0 %v456
  %v767 = vpop.f32.mrf.mxu0
  %v768 = vadd.f32 0.0, %v767
  %v769 = vpop.f32.mrf.mxu0
  %v770 = vadd.f32 0.0, %v769
  %771 = vmatmul.bf16.gmra.mxu0 %v458
  %v772 = vpop.f32.mrf.mxu0
  %v773 = vadd.f32 0.0, %v772
  %v774 = vpop.f32.mrf.mxu0
  %v775 = vadd.f32 0.0, %v774
  %776 = vmatmul.bf16.gmra.mxu0 %v460
  %v777 = vpop.f32.mrf.mxu0
  %v778 = vadd.f32 0.0, %v777
  %v779 = vpop.f32.mrf.mxu0
  %v780 = vadd.f32 0.0, %v779
  %781 = vmatmul.bf16.gmra.mxu0 %v462
  %v782 = vpop.f32.mrf.mxu0
  %v783 = vadd.f32 0.0, %v782
  %v784 = vpop.f32.mrf.mxu0
  %v785 = vadd.f32 0.0, %v784
  %786 = vmatmul.bf16.gmra.mxu0 %v464
  %v787 = vpop.f32.mrf.mxu0
  %v788 = vadd.f32 0.0, %v787
  %v789 = vpop.f32.mrf.mxu0
  %v790 = vadd.f32 0.0, %v789
  %791 = vmatmul.bf16.gmra.mxu0 %v466
  %v792 = vpop.f32.mrf.mxu0
  %v793 = vadd.f32 0.0, %v792
  %v794 = vpop.f32.mrf.mxu0
  %v795 = vadd.f32 0.0, %v794
  %796 = vmatmul.bf16.gmra.mxu0 %v468
  %v797 = vpop.f32.mrf.mxu0
  %v798 = vadd.f32 0.0, %v797
  %v799 = vpop.f32.mrf.mxu0
  %v800 = vadd.f32 0.0, %v799
  %801 = vmatmul.bf16.gmra.mxu0 %v470
  %v802 = vpop.f32.mrf.mxu0
  %v803 = vadd.f32 0.0, %v802
  %v804 = vpop.f32.mrf.mxu0
  %v805 = vadd.f32 0.0, %v804
  %806 = vmatmul.bf16.gmra.mxu0 %v472
  %v807 = vpop.f32.mrf.mxu0
  %v808 = vadd.f32 0.0, %v807
  %v809 = vpop.f32.mrf.mxu0
  %v810 = vadd.f32 0.0, %v809
  %811 = vmatmul.bf16.gmra.mxu0 %v474
  %v812 = vpop.f32.mrf.mxu0
  %v813 = vadd.f32 0.0, %v812
  %v814 = vpop.f32.mrf.mxu0
  %v815 = vadd.f32 0.0, %v814
  %816 = vmatmul.bf16.gmra.mxu0 %v476
  %v817 = vpop.f32.mrf.mxu0
  %v818 = vadd.f32 0.0, %v817
  %v819 = vpop.f32.mrf.mxu0
  %v820 = vadd.f32 0.0, %v819
  %821 = vmatmul.bf16.gmra.mxu0 %v478
  %v822 = vpop.f32.mrf.mxu0
  %v823 = vadd.f32 0.0, %v822
  %v824 = vpop.f32.mrf.mxu0
  %v825 = vadd.f32 0.0, %v824
  %826 = vmatmul.bf16.gmra.mxu0 %v480
  %v827 = vpop.f32.mrf.mxu0
  %v828 = vadd.f32 0.0, %v827
  %v829 = vpop.f32.mrf.mxu0
  %v830 = vadd.f32 0.0, %v829
  %831 = vmatmul.bf16.gmra.mxu0 %v482
  %v832 = vpop.f32.mrf.mxu0
  %v833 = vadd.f32 0.0, %v832
  %v834 = vpop.f32.mrf.mxu0
  %v835 = vadd.f32 0.0, %v834
  %836 = vmatmul.bf16.gmra.mxu0 %v484
  %v837 = vpop.f32.mrf.mxu0
  %v838 = vadd.f32 0.0, %v837
  %v839 = vpop.f32.mrf.mxu0
  %v840 = vadd.f32 0.0, %v839
  %841 = vmatmul.bf16.gmra.mxu0 %v486
  %v842 = vpop.f32.mrf.mxu0
  %v843 = vadd.f32 0.0, %v842
  %v844 = vpop.f32.mrf.mxu0
  %v845 = vadd.f32 0.0, %v844
  %846 = vmatmul.bf16.gmra.mxu0 %v488
  %v847 = vpop.f32.mrf.mxu0
  %v848 = vadd.f32 0.0, %v847
  %v849 = vpop.f32.mrf.mxu0
  %v850 = vadd.f32 0.0, %v849
  %851 = vdwg.mxu0
  %852 = vmatpush.bf16.msra.mxu0 0
  %853 = vmatpush.bf16.msra.mxu0 0
  %854 = vmatpush.bf16.msra.mxu0 0
  %855 = vmatpush.bf16.msra.mxu0 0
  %856 = vmatpush.bf16.msra.mxu0 0
  %857 = vmatpush.bf16.msra.mxu0 0
  %858 = vmatpush.bf16.msra.mxu0 %v681
  %859 = vmatpush.bf16.msra.mxu0 %v568
  %860 = vmatmul.bf16.gmra.mxu0 %v581
  %v861 = vpop.f32.mrf.mxu0
  %v862 = vadd.f32 %v693, %v861
  %v863 = vpop.f32.mrf.mxu0
  %v864 = vadd.f32 %v695, %v863
  %865 = vmatmul.bf16.gmra.mxu0 %v584
  %v866 = vpop.f32.mrf.mxu0
  %v867 = vadd.f32 %v698, %v866
  %v868 = vpop.f32.mrf.mxu0
  %v869 = vadd.f32 %v700, %v868
  %870 = vmatmul.bf16.gmra.mxu0 %v587
  %v871 = vpop.f32.mrf.mxu0
  %v872 = vadd.f32 %v703, %v871
  %v873 = vpop.f32.mrf.mxu0
  %v874 = vadd.f32 %v705, %v873
  %875 = vmatmul.bf16.gmra.mxu0 %v590
  %v876 = vpop.f32.mrf.mxu0
  %v877 = vadd.f32 %v708, %v876
  %v878 = vpop.f32.mrf.mxu0
  %v879 = vadd.f32 %v710, %v878
  %880 = vmatmul.bf16.gmra.mxu0 %v593
  %v881 = vpop.f32.mrf.mxu0
  %v882 = vadd.f32 %v713, %v881
  %v883 = vpop.f32.mrf.mxu0
  %v884 = vadd.f32 %v715, %v883
  %885 = vmatmul.bf16.gmra.mxu0 %v596
  %v886 = vpop.f32.mrf.mxu0
  %v887 = vadd.f32 %v718, %v886
  %v888 = vpop.f32.mrf.mxu0
  %v889 = vadd.f32 %v720, %v888
  %890 = vmatmul.bf16.gmra.mxu0 %v599
  %v891 = vpop.f32.mrf.mxu0
  %v892 = vadd.f32 %v723, %v891
  %v893 = vpop.f32.mrf.mxu0
  %v894 = vadd.f32 %v725, %v893
  %895 = vmatmul.bf16.gmra.mxu0 %v602
  %v896 = vpop.f32.mrf.mxu0
  %v897 = vadd.f32 %v728, %v896
  %v898 = vpop.f32.mrf.mxu0
  %v899 = vadd.f32 %v730, %v898
  %900 = vmatmul.bf16.gmra.mxu0 %v605
  %v901 = vpop.f32.mrf.mxu0
  %v902 = vadd.f32 %v733, %v901
  %v903 = vpop.f32.mrf.mxu0
  %v904 = vadd.f32 %v735, %v903
  %905 = vmatmul.bf16.gmra.mxu0 %v608
  %v906 = vpop.f32.mrf.mxu0
  %v907 = vadd.f32 %v738, %v906
  %v908 = vpop.f32.mrf.mxu0
  %v909 = vadd.f32 %v740, %v908
  %910 = vmatmul.bf16.gmra.mxu0 %v611
  %v911 = vpop.f32.mrf.mxu0
  %v912 = vadd.f32 %v743, %v911
  %v913 = vpop.f32.mrf.mxu0
  %v914 = vadd.f32 %v745, %v913
  %915 = vmatmul.bf16.gmra.mxu0 %v614
  %v916 = vpop.f32.mrf.mxu0
  %v917 = vadd.f32 %v748, %v916
  %v918 = vpop.f32.mrf.mxu0
  %v919 = vadd.f32 %v750, %v918
  %920 = vmatmul.bf16.gmra.mxu0 %v617
  %v921 = vpop.f32.mrf.mxu0
  %v922 = vadd.f32 %v753, %v921
  %v923 = vpop.f32.mrf.mxu0
  %v924 = vadd.f32 %v755, %v923
  %925 = vmatmul.bf16.gmra.mxu0 %v620
  %v926 = vpop.f32.mrf.mxu0
  %v927 = vadd.f32 %v758, %v926
  %v928 = vpop.f32.mrf.mxu0
  %v929 = vadd.f32 %v760, %v928
  %930 = vmatmul.bf16.gmra.mxu0 %v623
  %v931 = vpop.f32.mrf.mxu0
  %v932 = vadd.f32 %v763, %v931
  %v933 = vpop.f32.mrf.mxu0
  %v934 = vadd.f32 %v765, %v933
  %935 = vmatmul.bf16.gmra.mxu0 %v626
  %v936 = vpop.f32.mrf.mxu0
  %v937 = vadd.f32 %v768, %v936
  %v938 = vpop.f32.mrf.mxu0
  %v939 = vadd.f32 %v770, %v938
  %940 = vmatmul.bf16.gmra.mxu0 %v629
  %v941 = vpop.f32.mrf.mxu0
  %v942 = vadd.f32 %v773, %v941
  %v943 = vpop.f32.mrf.mxu0
  %v944 = vadd.f32 %v775, %v943
  %945 = vmatmul.bf16.gmra.mxu0 %v632
  %v946 = vpop.f32.mrf.mxu0
  %v947 = vadd.f32 %v778, %v946
  %v948 = vpop.f32.mrf.mxu0
  %v949 = vadd.f32 %v780, %v948
  %950 = vmatmul.bf16.gmra.mxu0 %v635
  %v951 = vpop.f32.mrf.mxu0
  %v952 = vadd.f32 %v783, %v951
  %v953 = vpop.f32.mrf.mxu0
  %v954 = vadd.f32 %v785, %v953
  %955 = vmatmul.bf16.gmra.mxu0 %v638
  %v956 = vpop.f32.mrf.mxu0
  %v957 = vadd.f32 %v788, %v956
  %v958 = vpop.f32.mrf.mxu0
  %v959 = vadd.f32 %v790, %v958
  %960 = vmatmul.bf16.gmra.mxu0 %v641
  %v961 = vpop.f32.mrf.mxu0
  %v962 = vadd.f32 %v793, %v961
  %v963 = vpop.f32.mrf.mxu0
  %v964 = vadd.f32 %v795, %v963
  %965 = vmatmul.bf16.gmra.mxu0 %v644
  %v966 = vpop.f32.mrf.mxu0
  %v967 = vadd.f32 %v798, %v966
  %v968 = vpop.f32.mrf.mxu0
  %v969 = vadd.f32 %v800, %v968
  %970 = vmatmul.bf16.gmra.mxu0 %v647
  %v971 = vpop.f32.mrf.mxu0
  %v972 = vadd.f32 %v803, %v971
  %v973 = vpop.f32.mrf.mxu0
  %v974 = vadd.f32 %v805, %v973
  %975 = vmatmul.bf16.gmra.mxu0 %v650
  %v976 = vpop.f32.mrf.mxu0
  %v977 = vadd.f32 %v808, %v976
  %v978 = vpop.f32.mrf.mxu0
  %v979 = vadd.f32 %v810, %v978
  %980 = vmatmul.bf16.gmra.mxu0 %v653
  %v981 = vpop.f32.mrf.mxu0
  %v982 = vadd.f32 %v813, %v981
  %v983 = vpop.f32.mrf.mxu0
  %v984 = vadd.f32 %v815, %v983
  %985 = vmatmul.bf16.gmra.mxu0 %v656
  %v986 = vpop.f32.mrf.mxu0
  %v987 = vadd.f32 %v818, %v986
  %v988 = vpop.f32.mrf.mxu0
  %v989 = vadd.f32 %v820, %v988
  %990 = vmatmul.bf16.gmra.mxu0 %v659
  %v991 = vpop.f32.mrf.mxu0
  %v992 = vadd.f32 %v823, %v991
  %v993 = vpop.f32.mrf.mxu0
  %v994 = vadd.f32 %v825, %v993
  %995 = vmatmul.bf16.gmra.mxu0 %v662
  %v996 = vpop.f32.mrf.mxu0
  %v997 = vadd.f32 %v828, %v996
  %v998 = vpop.f32.mrf.mxu0
  %v999 = vadd.f32 %v830, %v998
  %1000 = vmatmul.bf16.gmra.mxu0 %v665
  %v1001 = vpop.f32.mrf.mxu0
  %v1002 = vadd.f32 %v833, %v1001
  %v1003 = vpop.f32.mrf.mxu0
  %v1004 = vadd.f32 %v835, %v1003
  %1005 = vmatmul.bf16.gmra.mxu0 %v668
  %v1006 = vpop.f32.mrf.mxu0
  %v1007 = vadd.f32 %v838, %v1006
  %v1008 = vpop.f32.mrf.mxu0
  %v1009 = vadd.f32 %v840, %v1008
  %1010 = vmatmul.bf16.gmra.mxu0 %v671
  %v1011 = vpop.f32.mrf.mxu0
  %v1012 = vadd.f32 %v843, %v1011
  %v1013 = vpop.f32.mrf.mxu0
  %v1014 = vadd.f32 %v845, %v1013
  %1015 = vmatmul.bf16.gmra.mxu0 %v674
  %v1016 = vpop.f32.mrf.mxu0
  %v1017 = vadd.f32 %v848, %v1016
  %v1018 = vpop.f32.mrf.mxu0
  %v1019 = vadd.f32 %v850, %v1018
  %1020 = vdwg.mxu0
  %v1021 = vadd.f32 %v87, %v862
  %v1022 = vadd.f32 %v88, %v864
  %v1023 = vadd.f32 %v89, %v867
  %v1024 = vadd.f32 %v90, %v869
  %v1025 = vadd.f32 %v91, %v872
  %v1026 = vadd.f32 %v92, %v874
  %v1027 = vadd.f32 %v93, %v877
  %v1028 = vadd.f32 %v94, %v879
  %v1029 = vadd.f32 %v95, %v882
  %v1030 = vadd.f32 %v96, %v884
  %v1031 = vadd.f32 %v97, %v887
  %v1032 = vadd.f32 %v98, %v889
  %v1033 = vadd.f32 %v99, %v892
  %v1034 = vadd.f32 %v100, %v894
  %v1035 = vadd.f32 %v101, %v897
  %v1036 = vadd.f32 %v102, %v899
  %v1037 = vadd.f32 %v103, %v902
  %v1038 = vadd.f32 %v104, %v904
  %v1039 = vadd.f32 %v105, %v907
  %v1040 = vadd.f32 %v106, %v909
  %v1041 = vadd.f32 %v107, %v912
  %v1042 = vadd.f32 %v108, %v914
  %v1043 = vadd.f32 %v109, %v917
  %v1044 = vadd.f32 %v110, %v919
  %v1045 = vadd.f32 %v111, %v922
  %v1046 = vadd.f32 %v112, %v924
  %v1047 = vadd.f32 %v113, %v927
  %v1048 = vadd.f32 %v114, %v929
  %v1049 = vadd.f32 %v115, %v932
  %v1050 = vadd.f32 %v116, %v934
  %v1051 = vadd.f32 %v117, %v937
  %v1052 = vadd.f32 %v118, %v939
  %v1053 = vadd.f32 %v119, %v942
  %v1054 = vadd.f32 %v120, %v944
  %v1055 = vadd.f32 %v121, %v947
  %v1056 = vadd.f32 %v122, %v949
  %v1057 = vadd.f32 %v123, %v952
  %v1058 = vadd.f32 %v124, %v954
  %v1059 = vadd.f32 %v125, %v957
  %v1060 = vadd.f32 %v126, %v959
  %v1061 = vadd.f32 %v127, %v962
  %v1062 = vadd.f32 %v128, %v964
  %v1063 = vadd.f32 %v129, %v967
  %v1064 = vadd.f32 %v130, %v969
  %v1065 = vadd.f32 %v131, %v972
  %v1066 = vadd.f32 %v132, %v974
  %v1067 = vadd.f32 %v133, %v977
  %v1068 = vadd.f32 %v134, %v979
  %v1069 = vadd.f32 %v135, %v982
  %v1070 = vadd.f32 %v136, %v984
  %v1071 = vadd.f32 %v137, %v987
  %v1072 = vadd.f32 %v138, %v989
  %v1073 = vadd.f32 %v139, %v992
  %v1074 = vadd.f32 %v140, %v994
  %v1075 = vadd.f32 %v141, %v997
  %v1076 = vadd.f32 %v142, %v999
  %v1077 = vadd.f32 %v143, %v1002
  %v1078 = vadd.f32 %v144, %v1004
  %v1079 = vadd.f32 %v145, %v1007
  %v1080 = vadd.f32 %v146, %v1009
  %v1081 = vadd.f32 %v147, %v1012
  %v1082 = vadd.f32 %v148, %v1014
  %v1083 = vadd.f32 %v149, %v1017
  %v1084 = vadd.f32 %v150, %v1019
  %vm1085 = vcmask 523264
  %1086 = vst.msk [vmem:[#allocation2] sm:$0xff] %vm1085, %v1021
  %1087 = vst.msk [vmem:[#allocation2 + $0x8] sm:$0xff] %vm1085, %v1022
  %1088 = vst.msk [vmem:[#allocation2 + $0x10] sm:$0xff] %vm1085, %v1023
  %1089 = vst.msk [vmem:[#allocation2 + $0x18] sm:$0xff] %vm1085, %v1024
  %1090 = vst.msk [vmem:[#allocation2 + $0x20] sm:$0xff] %vm1085, %v1025
  %1091 = vst.msk [vmem:[#allocation2 + $0x28] sm:$0xff] %vm1085, %v1026
  %1092 = vst.msk [vmem:[#allocation2 + $0x30] sm:$0xff] %vm1085, %v1027
  %1093 = vst.msk [vmem:[#allocation2 + $0x38] sm:$0xff] %vm1085, %v1028
  %1094 = vst.msk [vmem:[#allocation2 + $0x40] sm:$0xff] %vm1085, %v1029
  %1095 = vst.msk [vmem:[#allocation2 + $0x48] sm:$0xff] %vm1085, %v1030
  %1096 = vst.msk [vmem:[#allocation2 + $0x50] sm:$0xff] %vm1085, %v1031
  %1097 = vst.msk [vmem:[#allocation2 + $0x58] sm:$0xff] %vm1085, %v1032
  %1098 = vst.msk [vmem:[#allocation2 + $0x60] sm:$0xff] %vm1085, %v1033
  %1099 = vst.msk [vmem:[#allocation2 + $0x68] sm:$0xff] %vm1085, %v1034
  %1100 = vst.msk [vmem:[#allocation2 + $0x70] sm:$0xff] %vm1085, %v1035
  %1101 = vst.msk [vmem:[#allocation2 + $0x78] sm:$0xff] %vm1085, %v1036
  %1102 = vst.msk [vmem:[#allocation2 + $0x80] sm:$0xff] %vm1085, %v1037
  %1103 = vst.msk [vmem:[#allocation2 + $0x88] sm:$0xff] %vm1085, %v1038
  %1104 = vst.msk [vmem:[#allocation2 + $0x90] sm:$0xff] %vm1085, %v1039
  %1105 = vst.msk [vmem:[#allocation2 + $0x98] sm:$0xff] %vm1085, %v1040
  %1106 = vst.msk [vmem:[#allocation2 + $0xa0] sm:$0xff] %vm1085, %v1041
  %1107 = vst.msk [vmem:[#allocation2 + $0xa8] sm:$0xff] %vm1085, %v1042
  %1108 = vst.msk [vmem:[#allocation2 + $0xb0] sm:$0xff] %vm1085, %v1043
  %1109 = vst.msk [vmem:[#allocation2 + $0xb8] sm:$0xff] %vm1085, %v1044
  %1110 = vst.msk [vmem:[#allocation2 + $0xc0] sm:$0xff] %vm1085, %v1045
  %1111 = vst.msk [vmem:[#allocation2 + $0xc8] sm:$0xff] %vm1085, %v1046
  %1112 = vst.msk [vmem:[#allocation2 + $0xd0] sm:$0xff] %vm1085, %v1047
  %1113 = vst.msk [vmem:[#allocation2 + $0xd8] sm:$0xff] %vm1085, %v1048
  %1114 = vst.msk [vmem:[#allocation2 + $0xe0] sm:$0xff] %vm1085, %v1049
  %1115 = vst.msk [vmem:[#allocation2 + $0xe8] sm:$0xff] %vm1085, %v1050
  %1116 = vst.msk [vmem:[#allocation2 + $0xf0] sm:$0xff] %vm1085, %v1051
  %1117 = vst.msk [vmem:[#allocation2 + $0xf8] sm:$0xff] %vm1085, %v1052
  %1118 = vst.msk [vmem:[#allocation2 + $0x100] sm:$0xff] %vm1085, %v1053
  %1119 = vst.msk [vmem:[#allocation2 + $0x108] sm:$0xff] %vm1085, %v1054
  %1120 = vst.msk [vmem:[#allocation2 + $0x110] sm:$0xff] %vm1085, %v1055
  %1121 = vst.msk [vmem:[#allocation2 + $0x118] sm:$0xff] %vm1085, %v1056
  %1122 = vst.msk [vmem:[#allocation2 + $0x120] sm:$0xff] %vm1085, %v1057
  %1123 = vst.msk [vmem:[#allocation2 + $0x128] sm:$0xff] %vm1085, %v1058
  %1124 = vst.msk [vmem:[#allocation2 + $0x130] sm:$0xff] %vm1085, %v1059
  %1125 = vst.msk [vmem:[#allocation2 + $0x138] sm:$0xff] %vm1085, %v1060
  %1126 = vst.msk [vmem:[#allocation2 + $0x140] sm:$0xff] %vm1085, %v1061
  %1127 = vst.msk [vmem:[#allocation2 + $0x148] sm:$0xff] %vm1085, %v1062
  %1128 = vst.msk [vmem:[#allocation2 + $0x150] sm:$0xff] %vm1085, %v1063
  %1129 = vst.msk [vmem:[#allocation2 + $0x158] sm:$0xff] %vm1085, %v1064
  %1130 = vst.msk [vmem:[#allocation2 + $0x160] sm:$0xff] %vm1085, %v1065
  %1131 = vst.msk [vmem:[#allocation2 + $0x168] sm:$0xff] %vm1085, %v1066
  %1132 = vst.msk [vmem:[#allocation2 + $0x170] sm:$0xff] %vm1085, %v1067
  %1133 = vst.msk [vmem:[#allocation2 + $0x178] sm:$0xff] %vm1085, %v1068
  %1134 = vst.msk [vmem:[#allocation2 + $0x180] sm:$0xff] %vm1085, %v1069
  %1135 = vst.msk [vmem:[#allocation2 + $0x188] sm:$0xff] %vm1085, %v1070
  %1136 = vst.msk [vmem:[#allocation2 + $0x190] sm:$0xff] %vm1085, %v1071
  %1137 = vst.msk [vmem:[#allocation2 + $0x198] sm:$0xff] %vm1085, %v1072
  %1138 = vst.msk [vmem:[#allocation2 + $0x1a0] sm:$0xff] %vm1085, %v1073
  %1139 = vst.msk [vmem:[#allocation2 + $0x1a8] sm:$0xff] %vm1085, %v1074
  %1140 = vst.msk [vmem:[#allocation2 + $0x1b0] sm:$0xff] %vm1085, %v1075
  %1141 = vst.msk [vmem:[#allocation2 + $0x1b8] sm:$0xff] %vm1085, %v1076
  %1142 = vst.msk [vmem:[#allocation2 + $0x1c0] sm:$0xff] %vm1085, %v1077
  %1143 = vst.msk [vmem:[#allocation2 + $0x1c8] sm:$0xff] %vm1085, %v1078
  %1144 = vst.msk [vmem:[#allocation2 + $0x1d0] sm:$0xff] %vm1085, %v1079
  %1145 = vst.msk [vmem:[#allocation2 + $0x1d8] sm:$0xff] %vm1085, %v1080
  %1146 = vst.msk [vmem:[#allocation2 + $0x1e0] sm:$0xff] %vm1085, %v1081
  %1147 = vst.msk [vmem:[#allocation2 + $0x1e8] sm:$0xff] %vm1085, %v1082
  %1148 = vst.msk [vmem:[#allocation2 + $0x1f0] sm:$0xff] %vm1085, %v1083
  %1149 = vst.msk [vmem:[#allocation2 + $0x1f8] sm:$0xff] %vm1085, %v1084
  // Predicated region
  $region22: #{pallas_matmul.1} parent=0 // pred_check
    %p1150 = pneg %p18
  $region23: #{pallas_matmul.1} parent=0 // pred_check_branch
    %1152 = sbr.rel (%p1150) target = $region25
  $region24: #{pallas_matmul.1} parent=0 // pred_region
    %v1153 = vld [vmem:[#allocation2] sm:$0xff]
    %v1154 = vld [vmem:[#allocation2 + $0x8] sm:$0xff]
    %v1155 = vld [vmem:[#allocation2 + $0x10] sm:$0xff]
    %v1156 = vld [vmem:[#allocation2 + $0x18] sm:$0xff]
    %v1157 = vld [vmem:[#allocation2 + $0x20] sm:$0xff]
    %v1158 = vld [vmem:[#allocation2 + $0x28] sm:$0xff]
    %v1159 = vld [vmem:[#allocation2 + $0x30] sm:$0xff]
    %v1160 = vld [vmem:[#allocation2 + $0x38] sm:$0xff]
    %v1161 = vld [vmem:[#allocation2 + $0x40] sm:$0xff]
    %v1162 = vld [vmem:[#allocation2 + $0x48] sm:$0xff]
    %v1163 = vld [vmem:[#allocation2 + $0x50] sm:$0xff]
    %v1164 = vld [vmem:[#allocation2 + $0x58] sm:$0xff]
    %v1165 = vld [vmem:[#allocation2 + $0x60] sm:$0xff]
    %v1166 = vld [vmem:[#allocation2 + $0x68] sm:$0xff]
    %v1167 = vld [vmem:[#allocation2 + $0x70] sm:$0xff]
    %v1168 = vld [vmem:[#allocation2 + $0x78] sm:$0xff]
    %v1169 = vld [vmem:[#allocation2 + $0x80] sm:$0xff]
    %v1170 = vld [vmem:[#allocation2 + $0x88] sm:$0xff]
    %v1171 = vld [vmem:[#allocation2 + $0x90] sm:$0xff]
    %v1172 = vld [vmem:[#allocation2 + $0x98] sm:$0xff]
    %v1173 = vld [vmem:[#allocation2 + $0xa0] sm:$0xff]
    %v1174 = vld [vmem:[#allocation2 + $0xa8] sm:$0xff]
    %v1175 = vld [vmem:[#allocation2 + $0xb0] sm:$0xff]
    %v1176 = vld [vmem:[#allocation2 + $0xb8] sm:$0xff]
    %v1177 = vld [vmem:[#allocation2 + $0xc0] sm:$0xff]
    %v1178 = vld [vmem:[#allocation2 + $0xc8] sm:$0xff]
    %v1179 = vld [vmem:[#allocation2 + $0xd0] sm:$0xff]
    %v1180 = vld [vmem:[#allocation2 + $0xd8] sm:$0xff]
    %v1181 = vld [vmem:[#allocation2 + $0xe0] sm:$0xff]
    %v1182 = vld [vmem:[#allocation2 + $0xe8] sm:$0xff]
    %v1183 = vld [vmem:[#allocation2 + $0xf0] sm:$0xff]
    %v1184 = vld [vmem:[#allocation2 + $0xf8] sm:$0xff]
    %v1185 = vld [vmem:[#allocation2 + $0x100] sm:$0xff]
    %v1186 = vld [vmem:[#allocation2 + $0x108] sm:$0xff]
    %v1187 = vld [vmem:[#allocation2 + $0x110] sm:$0xff]
    %v1188 = vld [vmem:[#allocation2 + $0x118] sm:$0xff]
    %v1189 = vld [vmem:[#allocation2 + $0x120] sm:$0xff]
    %v1190 = vld [vmem:[#allocation2 + $0x128] sm:$0xff]
    %v1191 = vld [vmem:[#allocation2 + $0x130] sm:$0xff]
    %v1192 = vld [vmem:[#allocation2 + $0x138] sm:$0xff]
    %v1193 = vld [vmem:[#allocation2 + $0x140] sm:$0xff]
    %v1194 = vld [vmem:[#allocation2 + $0x148] sm:$0xff]
    %v1195 = vld [vmem:[#allocation2 + $0x150] sm:$0xff]
    %v1196 = vld [vmem:[#allocation2 + $0x158] sm:$0xff]
    %v1197 = vld [vmem:[#allocation2 + $0x160] sm:$0xff]
    %v1198 = vld [vmem:[#allocation2 + $0x168] sm:$0xff]
    %v1199 = vld [vmem:[#allocation2 + $0x170] sm:$0xff]
    %v1200 = vld [vmem:[#allocation2 + $0x178] sm:$0xff]
    %v1201 = vld [vmem:[#allocation2 + $0x180] sm:$0xff]
    %v1202 = vld [vmem:[#allocation2 + $0x188] sm:$0xff]
    %v1203 = vld [vmem:[#allocation2 + $0x190] sm:$0xff]
    %v1204 = vld [vmem:[#allocation2 + $0x198] sm:$0xff]
    %v1205 = vld [vmem:[#allocation2 + $0x1a0] sm:$0xff]
    %v1206 = vld [vmem:[#allocation2 + $0x1a8] sm:$0xff]
    %v1207 = vld [vmem:[#allocation2 + $0x1b0] sm:$0xff]
    %v1208 = vld [vmem:[#allocation2 + $0x1b8] sm:$0xff]
    %v1209 = vld [vmem:[#allocation2 + $0x1c0] sm:$0xff]
    %v1210 = vld [vmem:[#allocation2 + $0x1c8] sm:$0xff]
    %v1211 = vld [vmem:[#allocation2 + $0x1d0] sm:$0xff]
    %v1212 = vld [vmem:[#allocation2 + $0x1d8] sm:$0xff]
    %v1213 = vld [vmem:[#allocation2 + $0x1e0] sm:$0xff]
    %v1214 = vld [vmem:[#allocation2 + $0x1e8] sm:$0xff]
    %v1215 = vld [vmem:[#allocation2 + $0x1f0] sm:$0xff]
    %v1216 = vld [vmem:[#allocation2 + $0x1f8] sm:$0xff]
    %v1217 = vld [vmem:[%s2] sm:$0x1]
    %v1219 = vperm.slane %v1217, 0
    %v1221 = vmul.f32 %v1153, %v1219
    %v1222 = vmul.f32 %v1154, %v1219
    %v1223 = vmul.f32 %v1155, %v1219
    %v1224 = vmul.f32 %v1156, %v1219
    %v1225 = vmul.f32 %v1157, %v1219
    %v1226 = vmul.f32 %v1158, %v1219
    %v1227 = vmul.f32 %v1159, %v1219
    %v1228 = vmul.f32 %v1160, %v1219
    %v1229 = vmul.f32 %v1161, %v1219
    %v1230 = vmul.f32 %v1162, %v1219
    %v1231 = vmul.f32 %v1163, %v1219
    %v1232 = vmul.f32 %v1164, %v1219
    %v1233 = vmul.f32 %v1165, %v1219
    %v1234 = vmul.f32 %v1166, %v1219
    %v1235 = vmul.f32 %v1167, %v1219
    %v1236 = vmul.f32 %v1168, %v1219
    %v1237 = vmul.f32 %v1169, %v1219
    %v1238 = vmul.f32 %v1170, %v1219
    %v1239 = vmul.f32 %v1171, %v1219
    %v1240 = vmul.f32 %v1172, %v1219
    %v1241 = vmul.f32 %v1173, %v1219
    %v1242 = vmul.f32 %v1174, %v1219
    %v1243 = vmul.f32 %v1175, %v1219
    %v1244 = vmul.f32 %v1176, %v1219
    %v1245 = vmul.f32 %v1177, %v1219
    %v1246 = vmul.f32 %v1178, %v1219
    %v1247 = vmul.f32 %v1179, %v1219
    %v1248 = vmul.f32 %v1180, %v1219
    %v1249 = vmul.f32 %v1181, %v1219
    %v1250 = vmul.f32 %v1182, %v1219
    %v1251 = vmul.f32 %v1183, %v1219
    %v1252 = vmul.f32 %v1184, %v1219
    %v1253 = vmul.f32 %v1185, %v1219
    %v1254 = vmul.f32 %v1186, %v1219
    %v1255 = vmul.f32 %v1187, %v1219
    %v1256 = vmul.f32 %v1188, %v1219
    %v1257 = vmul.f32 %v1189, %v1219
    %v1258 = vmul.f32 %v1190, %v1219
    %v1259 = vmul.f32 %v1191, %v1219
    %v1260 = vmul.f32 %v1192, %v1219
    %v1261 = vmul.f32 %v1193, %v1219
    %v1262 = vmul.f32 %v1194, %v1219
    %v1263 = vmul.f32 %v1195, %v1219
    %v1264 = vmul.f32 %v1196, %v1219
    %v1265 = vmul.f32 %v1197, %v1219
    %v1266 = vmul.f32 %v1198, %v1219
    %v1267 = vmul.f32 %v1199, %v1219
    %v1268 = vmul.f32 %v1200, %v1219
    %v1269 = vmul.f32 %v1201, %v1219
    %v1270 = vmul.f32 %v1202, %v1219
    %v1271 = vmul.f32 %v1203, %v1219
    %v1272 = vmul.f32 %v1204, %v1219
    %v1273 = vmul.f32 %v1205, %v1219
    %v1274 = vmul.f32 %v1206, %v1219
    %v1275 = vmul.f32 %v1207, %v1219
    %v1276 = vmul.f32 %v1208, %v1219
    %v1277 = vmul.f32 %v1209, %v1219
    %v1278 = vmul.f32 %v1210, %v1219
    %v1279 = vmul.f32 %v1211, %v1219
    %v1280 = vmul.f32 %v1212, %v1219
    %v1281 = vmul.f32 %v1213, %v1219
    %v1282 = vmul.f32 %v1214, %v1219
    %v1283 = vmul.f32 %v1215, %v1219
    %v1284 = vmul.f32 %v1216, %v1219
    %v1285 = vld [vmem:[%s3] sm:$0x1]
    %v1287 = vperm.slane %v1285, 0
    %v1289 = vadd.f32 %v1221, %v1287
    %v1290 = vadd.f32 %v1222, %v1287
    %v1291 = vadd.f32 %v1223, %v1287
    %v1292 = vadd.f32 %v1224, %v1287
    %v1293 = vadd.f32 %v1225, %v1287
    %v1294 = vadd.f32 %v1226, %v1287
    %v1295 = vadd.f32 %v1227, %v1287
    %v1296 = vadd.f32 %v1228, %v1287
    %v1297 = vadd.f32 %v1229, %v1287
    %v1298 = vadd.f32 %v1230, %v1287
    %v1299 = vadd.f32 %v1231, %v1287
    %v1300 = vadd.f32 %v1232, %v1287
    %v1301 = vadd.f32 %v1233, %v1287
    %v1302 = vadd.f32 %v1234, %v1287
    %v1303 = vadd.f32 %v1235, %v1287
    %v1304 = vadd.f32 %v1236, %v1287
    %v1305 = vadd.f32 %v1237, %v1287
    %v1306 = vadd.f32 %v1238, %v1287
    %v1307 = vadd.f32 %v1239, %v1287
    %v1308 = vadd.f32 %v1240, %v1287
    %v1309 = vadd.f32 %v1241, %v1287
    %v1310 = vadd.f32 %v1242, %v1287
    %v1311 = vadd.f32 %v1243, %v1287
    %v1312 = vadd.f32 %v1244, %v1287
    %v1313 = vadd.f32 %v1245, %v1287
    %v1314 = vadd.f32 %v1246, %v1287
    %v1315 = vadd.f32 %v1247, %v1287
    %v1316 = vadd.f32 %v1248, %v1287
    %v1317 = vadd.f32 %v1249, %v1287
    %v1318 = vadd.f32 %v1250, %v1287
    %v1319 = vadd.f32 %v1251, %v1287
    %v1320 = vadd.f32 %v1252, %v1287
    %v1321 = vadd.f32 %v1253, %v1287
    %v1322 = vadd.f32 %v1254, %v1287
    %v1323 = vadd.f32 %v1255, %v1287
    %v1324 = vadd.f32 %v1256, %v1287
    %v1325 = vadd.f32 %v1257, %v1287
    %v1326 = vadd.f32 %v1258, %v1287
    %v1327 = vadd.f32 %v1259, %v1287
    %v1328 = vadd.f32 %v1260, %v1287
    %v1329 = vadd.f32 %v1261, %v1287
    %v1330 = vadd.f32 %v1262, %v1287
    %v1331 = vadd.f32 %v1263, %v1287
    %v1332 = vadd.f32 %v1264, %v1287
    %v1333 = vadd.f32 %v1265, %v1287
    %v1334 = vadd.f32 %v1266, %v1287
    %v1335 = vadd.f32 %v1267, %v1287
    %v1336 = vadd.f32 %v1268, %v1287
    %v1337 = vadd.f32 %v1269, %v1287
    %v1338 = vadd.f32 %v1270, %v1287
    %v1339 = vadd.f32 %v1271, %v1287
    %v1340 = vadd.f32 %v1272, %v1287
    %v1341 = vadd.f32 %v1273, %v1287
    %v1342 = vadd.f32 %v1274, %v1287
    %v1343 = vadd.f32 %v1275, %v1287
    %v1344 = vadd.f32 %v1276, %v1287
    %v1345 = vadd.f32 %v1277, %v1287
    %v1346 = vadd.f32 %v1278, %v1287
    %v1347 = vadd.f32 %v1279, %v1287
    %v1348 = vadd.f32 %v1280, %v1287
    %v1349 = vadd.f32 %v1281, %v1287
    %v1350 = vadd.f32 %v1282, %v1287
    %v1351 = vadd.f32 %v1283, %v1287
    %v1352 = vadd.f32 %v1284, %v1287
    %v1353 = vmax.f32 %v1289, 0.0
    %v1354 = vmax.f32 %v1290, 0.0
    %v1355 = vmax.f32 %v1291, 0.0
    %v1356 = vmax.f32 %v1292, 0.0
    %v1357 = vmax.f32 %v1293, 0.0
    %v1358 = vmax.f32 %v1294, 0.0
    %v1359 = vmax.f32 %v1295, 0.0
    %v1360 = vmax.f32 %v1296, 0.0
    %v1361 = vmax.f32 %v1297, 0.0
    %v1362 = vmax.f32 %v1298, 0.0
    %v1363 = vmax.f32 %v1299, 0.0
    %v1364 = vmax.f32 %v1300, 0.0
    %v1365 = vmax.f32 %v1301, 0.0
    %v1366 = vmax.f32 %v1302, 0.0
    %v1367 = vmax.f32 %v1303, 0.0
    %v1368 = vmax.f32 %v1304, 0.0
    %v1369 = vmax.f32 %v1305, 0.0
    %v1370 = vmax.f32 %v1306, 0.0
    %v1371 = vmax.f32 %v1307, 0.0
    %v1372 = vmax.f32 %v1308, 0.0
    %v1373 = vmax.f32 %v1309, 0.0
    %v1374 = vmax.f32 %v1310, 0.0
    %v1375 = vmax.f32 %v1311, 0.0
    %v1376 = vmax.f32 %v1312, 0.0
    %v1377 = vmax.f32 %v1313, 0.0
    %v1378 = vmax.f32 %v1314, 0.0
    %v1379 = vmax.f32 %v1315, 0.0
    %v1380 = vmax.f32 %v1316, 0.0
    %v1381 = vmax.f32 %v1317, 0.0
    %v1382 = vmax.f32 %v1318, 0.0
    %v1383 = vmax.f32 %v1319, 0.0
    %v1384 = vmax.f32 %v1320, 0.0
    %v1385 = vmax.f32 %v1321, 0.0
    %v1386 = vmax.f32 %v1322, 0.0
    %v1387 = vmax.f32 %v1323, 0.0
    %v1388 = vmax.f32 %v1324, 0.0
    %v1389 = vmax.f32 %v1325, 0.0
    %v1390 = vmax.f32 %v1326, 0.0
    %v1391 = vmax.f32 %v1327, 0.0
    %v1392 = vmax.f32 %v1328, 0.0
    %v1393 = vmax.f32 %v1329, 0.0
    %v1394 = vmax.f32 %v1330, 0.0
    %v1395 = vmax.f32 %v1331, 0.0
    %v1396 = vmax.f32 %v1332, 0.0
    %v1397 = vmax.f32 %v1333, 0.0
    %v1398 = vmax.f32 %v1334, 0.0
    %v1399 = vmax.f32 %v1335, 0.0
    %v1400 = vmax.f32 %v1336, 0.0
    %v1401 = vmax.f32 %v1337, 0.0
    %v1402 = vmax.f32 %v1338, 0.0
    %v1403 = vmax.f32 %v1339, 0.0
    %v1404 = vmax.f32 %v1340, 0.0
    %v1405 = vmax.f32 %v1341, 0.0
    %v1406 = vmax.f32 %v1342, 0.0
    %v1407 = vmax.f32 %v1343, 0.0
    %v1408 = vmax.f32 %v1344, 0.0
    %v1409 = vmax.f32 %v1345, 0.0
    %v1410 = vmax.f32 %v1346, 0.0
    %v1411 = vmax.f32 %v1347, 0.0
    %v1412 = vmax.f32 %v1348, 0.0
    %v1413 = vmax.f32 %v1349, 0.0
    %v1414 = vmax.f32 %v1350, 0.0
    %v1415 = vmax.f32 %v1351, 0.0
    %v1416 = vmax.f32 %v1352, 0.0
    %1417 = vst.msk [vmem:[%s4] sm:$0xff] %vm1085, %v1353
    %1418 = vst.msk [vmem:[%s4 + $0x8] sm:$0xff] %vm1085, %v1354
    %1419 = vst.msk [vmem:[%s4 + $0x10] sm:$0xff] %vm1085, %v1355
    %1420 = vst.msk [vmem:[%s4 + $0x18] sm:$0xff] %vm1085, %v1356
    %1421 = vst.msk [vmem:[%s4 + $0x20] sm:$0xff] %vm1085, %v1357
    %1422 = vst.msk [vmem:[%s4 + $0x28] sm:$0xff] %vm1085, %v1358
    %1423 = vst.msk [vmem:[%s4 + $0x30] sm:$0xff] %vm1085, %v1359
    %1424 = vst.msk [vmem:[%s4 + $0x38] sm:$0xff] %vm1085, %v1360
    %1425 = vst.msk [vmem:[%s4 + $0x40] sm:$0xff] %vm1085, %v1361
    %1426 = vst.msk [vmem:[%s4 + $0x48] sm:$0xff] %vm1085, %v1362
    %1427 = vst.msk [vmem:[%s4 + $0x50] sm:$0xff] %vm1085, %v1363
    %1428 = vst.msk [vmem:[%s4 + $0x58] sm:$0xff] %vm1085, %v1364
    %1429 = vst.msk [vmem:[%s4 + $0x60] sm:$0xff] %vm1085, %v1365
    %1430 = vst.msk [vmem:[%s4 + $0x68] sm:$0xff] %vm1085, %v1366
    %1431 = vst.msk [vmem:[%s4 + $0x70] sm:$0xff] %vm1085, %v1367
    %1432 = vst.msk [vmem:[%s4 + $0x78] sm:$0xff] %vm1085, %v1368
    %1433 = vst.msk [vmem:[%s4 + $0x80] sm:$0xff] %vm1085, %v1369
    %1434 = vst.msk [vmem:[%s4 + $0x88] sm:$0xff] %vm1085, %v1370
    %1435 = vst.msk [vmem:[%s4 + $0x90] sm:$0xff] %vm1085, %v1371
    %1436 = vst.msk [vmem:[%s4 + $0x98] sm:$0xff] %vm1085, %v1372
    %1437 = vst.msk [vmem:[%s4 + $0xa0] sm:$0xff] %vm1085, %v1373
    %1438 = vst.msk [vmem:[%s4 + $0xa8] sm:$0xff] %vm1085, %v1374
    %1439 = vst.msk [vmem:[%s4 + $0xb0] sm:$0xff] %vm1085, %v1375
    %1440 = vst.msk [vmem:[%s4 + $0xb8] sm:$0xff] %vm1085, %v1376
    %1441 = vst.msk [vmem:[%s4 + $0xc0] sm:$0xff] %vm1085, %v1377
    %1442 = vst.msk [vmem:[%s4 + $0xc8] sm:$0xff] %vm1085, %v1378
    %1443 = vst.msk [vmem:[%s4 + $0xd0] sm:$0xff] %vm1085, %v1379
    %1444 = vst.msk [vmem:[%s4 + $0xd8] sm:$0xff] %vm1085, %v1380
    %1445 = vst.msk [vmem:[%s4 + $0xe0] sm:$0xff] %vm1085, %v1381
    %1446 = vst.msk [vmem:[%s4 + $0xe8] sm:$0xff] %vm1085, %v1382
    %1447 = vst.msk [vmem:[%s4 + $0xf0] sm:$0xff] %vm1085, %v1383
    %1448 = vst.msk [vmem:[%s4 + $0xf8] sm:$0xff] %vm1085, %v1384
    %1449 = vst.msk [vmem:[%s4 + $0x100] sm:$0xff] %vm1085, %v1385
    %1450 = vst.msk [vmem:[%s4 + $0x108] sm:$0xff] %vm1085, %v1386
    %1451 = vst.msk [vmem:[%s4 + $0x110] sm:$0xff] %vm1085, %v1387
    %1452 = vst.msk [vmem:[%s4 + $0x118] sm:$0xff] %vm1085, %v1388
    %1453 = vst.msk [vmem:[%s4 + $0x120] sm:$0xff] %vm1085, %v1389
    %1454 = vst.msk [vmem:[%s4 + $0x128] sm:$0xff] %vm1085, %v1390
    %1455 = vst.msk [vmem:[%s4 + $0x130] sm:$0xff] %vm1085, %v1391
    %1456 = vst.msk [vmem:[%s4 + $0x138] sm:$0xff] %vm1085, %v1392
    %1457 = vst.msk [vmem:[%s4 + $0x140] sm:$0xff] %vm1085, %v1393
    %1458 = vst.msk [vmem:[%s4 + $0x148] sm:$0xff] %vm1085, %v1394
    %1459 = vst.msk [vmem:[%s4 + $0x150] sm:$0xff] %vm1085, %v1395
    %1460 = vst.msk [vmem:[%s4 + $0x158] sm:$0xff] %vm1085, %v1396
    %1461 = vst.msk [vmem:[%s4 + $0x160] sm:$0xff] %vm1085, %v1397
    %1462 = vst.msk [vmem:[%s4 + $0x168] sm:$0xff] %vm1085, %v1398
    %1463 = vst.msk [vmem:[%s4 + $0x170] sm:$0xff] %vm1085, %v1399
    %1464 = vst.msk [vmem:[%s4 + $0x178] sm:$0xff] %vm1085, %v1400
    %1465 = vst.msk [vmem:[%s4 + $0x180] sm:$0xff] %vm1085, %v1401
    %1466 = vst.msk [vmem:[%s4 + $0x188] sm:$0xff] %vm1085, %v1402
    %1467 = vst.msk [vmem:[%s4 + $0x190] sm:$0xff] %vm1085, %v1403
    %1468 = vst.msk [vmem:[%s4 + $0x198] sm:$0xff] %vm1085, %v1404
    %1469 = vst.msk [vmem:[%s4 + $0x1a0] sm:$0xff] %vm1085, %v1405
    %1470 = vst.msk [vmem:[%s4 + $0x1a8] sm:$0xff] %vm1085, %v1406
    %1471 = vst.msk [vmem:[%s4 + $0x1b0] sm:$0xff] %vm1085, %v1407
    %1472 = vst.msk [vmem:[%s4 + $0x1b8] sm:$0xff] %vm1085, %v1408
    %1473 = vst.msk [vmem:[%s4 + $0x1c0] sm:$0xff] %vm1085, %v1409
    %1474 = vst.msk [vmem:[%s4 + $0x1c8] sm:$0xff] %vm1085, %v1410
    %1475 = vst.msk [vmem:[%s4 + $0x1d0] sm:$0xff] %vm1085, %v1411
    %1476 = vst.msk [vmem:[%s4 + $0x1d8] sm:$0xff] %vm1085, %v1412
    %1477 = vst.msk [vmem:[%s4 + $0x1e0] sm:$0xff] %vm1085, %v1413
    %1478 = vst.msk [vmem:[%s4 + $0x1e8] sm:$0xff] %vm1085, %v1414
    %1479 = vst.msk [vmem:[%s4 + $0x1f0] sm:$0xff] %vm1085, %v1415
    %1480 = vst.msk [vmem:[%s4 + $0x1f8] sm:$0xff] %vm1085, %v1416
  $region25: #{pallas_matmul.1} parent=0 // pred_fallthru
    _
  // Predicated region
  $region26: #{pallas_matmul.1} parent=0 // pred_check
    _
  $region27: #{pallas_matmul.1} parent=0 // pred_check_branch
    %1482 = sbr.rel (0) target = $region29
  $region28: #{pallas_matmul.1} parent=0 // pred_region
    _
  $region29: #{pallas_matmul.1} parent=0 // pred_fallthru
    _
  // Predicated region
  $region30: #{pallas_matmul.1} parent=0 // pred_check
    _
  $region31: #{pallas_matmul.1} parent=0 // pred_check_branch
    %1484 = sbr.rel (0) target = $region33
  $region32: #{pallas_matmul.1} parent=0 // pred_region
    _
  $region33: #{pallas_matmul.1} parent=0 // pred_fallthru
    _

</llo_original>
